<compile_context>
chip_gen: v6e
topology: v6e:2x2x1
jax: 0.10.0
libtpu: 0.0.40
codegen_flags: <defaults>
</compile_context>

<pallas_src>
import functools

import jax
import jax.numpy as jnp
from jax import lax
from jax.experimental import pallas as pl
from jax.experimental.pallas import tpu as pltpu


def _relu6(x):
    return jnp.minimum(jnp.maximum(x, 0.0), 6.0)


_VPU_PW_MAX_K = 32   # contraction dims <= this run as VPU FMAs instead of MXU


def _pointwise(w, x):
    """1x1 conv  (Co, Ci) @ (Ci, L) -> (Co, L), f32 accumulation.

    For tiny Ci the MXU matmul is >90% K-padding (K padded to 128/256), so we
    unroll Ci broadcast-FMAs on the VPU and skip the MXU push/drain entirely.
    """
    ci = w.shape[1]
    if ci <= _VPU_PW_MAX_K:
        acc = w[:, 0:1] * x[0:1, :]
        for c in range(1, ci):
            acc = acc + w[:, c:c + 1] * x[c:c + 1, :]
        return acc
    return jnp.dot(w, x, preferred_element_type=jnp.float32)


def inverted_bottleneck_kernel(x_ref, const_ref, border_ref, o_ref, *,
                               residual, c1, c_mid, c2, width):
    x = x_ref[...].astype(jnp.float32)                    # (C1, L), L = Nb*H*W

    # Packed constants: [ w1 (c1 cols) | dw taps (9) | w3 (c_mid cols) | shifts (3) ]
    o_dw = c1
    o_w3 = c1 + 9
    o_sh = c1 + 9 + c_mid
    w1  = const_ref[0:c_mid, 0:c1]                        # (Cm, C1)
    w3  = const_ref[0:c2,    o_w3:o_w3 + c_mid]           # (C2, Cm)
    sh1 = const_ref[0:c_mid, o_sh + 0:o_sh + 1]           # (Cm, 1)
    sh2 = const_ref[0:c_mid, o_sh + 1:o_sh + 2]
    sh3 = const_ref[0:c2,    o_sh + 2:o_sh + 3]

    # ---- Stage 1: 1x1 expand (BN1 scale folded into w1) + shift + ReLU6
    y = _relu6(_pointwise(w1, x) + sh1)                   # (Cm, L)

    # ---- Stage 2: depthwise 3x3, stride 1, 'same' padding (BN2 scale folded).
    # Neighbour (di, dj) of a flattened pixel lives at lane offset di*W + dj;
    # XLU rolls + precomputed border masks replace padding / unaligned slices.
    # The 4 border comparisons are hoisted out of the 9-tap loop; folding the
    # batch into the lane axis is safe because every cross-image wrap lands on
    # a masked border position.
    up_ok    = border_ref[0:1, :] > 0.0    # row >= 1
    down_ok  = border_ref[1:2, :] > 0.0    # row <= H-2
    left_ok  = border_ref[2:3, :] > 0.0    # col >= 1
    right_ok = border_ref[3:4, :] > 0.0    # col <= W-2
    row_ok = {-1: up_ok, 1: down_ok}
    col_ok = {-1: left_ok, 1: right_ok}

    lanes = x.shape[1]
    acc = None
    k = 0
    for di in (-1, 0, 1):
        for dj in (-1, 0, 1):
            s = di * width + dj
            shifted = y if s == 0 else pltpu.roll(y, shift=(-s) % lanes, axis=1)
            mask = None
            if di != 0:
                mask = row_ok[di]
            if dj != 0:
                mask = col_ok[dj] if mask is None else (mask & col_ok[dj])
            if mask is not None:
                shifted = jnp.where(mask, shifted, 0.0)
            term = shifted * const_ref[0:c_mid, o_dw + k:o_dw + k + 1]
            acc = term if acc is None else acc + term     # init from first tap
            k += 1
    z = _relu6(acc + sh2)                                  # (Cm, L)

    # ---- Stage 3: 1x1 project (BN3 scale folded) + shift, no activation
    out = _pointwise(w3, z) + sh3                          # (C2, L)
    if residual:
        out = out + x                                      # c1 == c2, stride == 1
    o_ref[...] = out.astype(o_ref.dtype)


def _pick_images_per_block(n, c_work, hw, budget_bytes=8 << 20):
    """Largest divisor of n whose f32 working set fits a modest VMEM budget and
    whose lane width stays (8,128)-legal when it is a strict sub-block."""
    per_image = 4 * c_work * hw * 4      # ~4 live (Cm, HW) f32 slabs in stage 2
    cap = max(1, budget_bytes // max(per_image, 1))
    best = 1
    for d in range(1, n + 1):
        if n % d:
            continue
        if d > cap:
            break
        if d == n or (d * hw) % 128 == 0:
            best = d
    return best


def inverted_bottleneck_pallas(x_nchw, const, dims, *, residual):
    N, C1, H, W = x_nchw.shape
    c1, c_mid, c2 = dims
    assert c1 == C1
    HW = H * W

    # Lane-dense layout: channels on sublanes, (image, row, col) on lanes.
    x2d = x_nchw.transpose(1, 0, 2, 3).reshape(C1, N * HW)

    nb = _pick_images_per_block(N, max(c_mid, c1, c2), HW)
    steps = N // nb
    lanes = nb * HW

    # Border-validity masks (per-image pattern repeats, so one block-sized copy
    # serves every grid step; no integer divide anywhere in the kernel).
    rr = lax.broadcasted_iota(jnp.int32, (nb, H, W), 1).reshape(lanes)
    cc = lax.broadcasted_iota(jnp.int32, (nb, H, W), 2).reshape(lanes)
    border = jnp.stack([rr >= 1, rr <= H - 2, cc >= 1, cc <= W - 2]
                       ).astype(jnp.float32)               # (4, lanes)

    kernel = functools.partial(inverted_bottleneck_kernel, residual=residual,
                               c1=c1, c_mid=c_mid, c2=c2, width=W)

    x_spec_kwargs = {}
    if steps >= 3:
        # Deeper buffering only pays once there are several fat steps to overlap.
        x_spec_kwargs["pipeline_mode"] = pl.Buffered(3)

    out = pl.pallas_call(
        kernel,
        out_shape=jax.ShapeDtypeStruct((c2, N * HW), x_nchw.dtype),
        grid_spec=pltpu.PrefetchScalarGridSpec(
            num_scalar_prefetch=0,
            grid=(steps,),
            in_specs=[
                pl.BlockSpec((C1, lanes), lambda g: (0, g), **x_spec_kwargs),
                pl.BlockSpec(const.shape, lambda g: (0, 0)),
                pl.BlockSpec(border.shape, lambda g: (0, 0)),
            ],
            out_specs=pl.BlockSpec((c2, lanes), lambda g: (0, g)),
        ),
        compiler_params=pltpu.CompilerParams(
            dimension_semantics=("parallel",)),
    )(x2d, const, border)
    # TODO(synk): for production sizes (H,W >= 56, Cm >= 96) add an H-tile grid
    # axis with 1-row halos (rolls wrap within the tile, so row masks must be
    # re-derived per tile), chunk the depthwise stage over channel groups to
    # stay within the 64-vreg file, and set vmem_limit_bytes for v7x's 64 MiB.
    return out.reshape(c2, N, H, W).transpose(1, 0, 2, 3)


# ---------------------------------------------------------------------------
# Parameter construction (deterministic) and pure-JAX NCHW reference
# ---------------------------------------------------------------------------

def _bn_fold(gamma, beta, mean, var, conv_bias, eps=1e-5):
    scale = gamma / jnp.sqrt(var + eps)
    shift = beta - mean * scale + conv_bias * scale
    return scale, shift


def make_params(key, c1, c2, c_mid):
    ks = jax.random.split(key, 12)
    f = lambda k, shape, s=0.1: (s * jax.random.normal(k, shape)).astype(jnp.float32)

    # Conv1: 1x1, c1 -> c_mid (OIHW) + BN1
    w1_oihw = f(ks[0], (c_mid, c1, 1, 1))
    b1_conv = f(ks[1], (c_mid,))
    g1 = 1.0 + f(ks[2], (c_mid,)); be1 = f(ks[2], (c_mid,)) * 0.5
    m1 = f(ks[3], (c_mid,));       v1 = 1.0 + jnp.abs(f(ks[3], (c_mid,)))

    # Conv2: depthwise 3x3, groups = c_mid + BN2
    wdw_oihw = f(ks[4], (c_mid, 1, 3, 3))
    b2_conv = f(ks[5], (c_mid,))
    g2 = 1.0 + f(ks[6], (c_mid,)); be2 = f(ks[6], (c_mid,)) * 0.5
    m2 = f(ks[7], (c_mid,));       v2 = 1.0 + jnp.abs(f(ks[7], (c_mid,)))

    # Conv3: 1x1, c_mid -> c2 (with bias), then BN3
    w3_oihw = f(ks[8], (c2, c_mid, 1, 1))
    b3_conv = f(ks[9], (c2,))
    g3 = 1.0 + f(ks[10], (c2,));   be3 = f(ks[10], (c2,)) * 0.5
    m3 = f(ks[11], (c2,));         v3 = 1.0 + jnp.abs(f(ks[11], (c2,)))

    torch_params = dict(
        w1=w1_oihw, b1=b1_conv, bn1=(g1, be1, m1, v1),
        wdw=wdw_oihw, b2=b2_conv, bn2=(g2, be2, m2, v2),
        w3=w3_oihw, b3=b3_conv, bn3=(g3, be3, m3, v3),
    )

    # Fold BN scales into the conv weights; keep only per-channel shifts.
    s1, sh1 = _bn_fold(g1, be1, m1, v1, b1_conv)
    s2, sh2 = _bn_fold(g2, be2, m2, v2, b2_conv)
    s3, sh3 = _bn_fold(g3, be3, m3, v3, b3_conv)

    w1s = w1_oihw[:, :, 0, 0] * s1[:, None]                  # (c_mid, c1)
    wdw_s = wdw_oihw[:, 0].reshape(c_mid, 9) * s2[:, None]   # (c_mid, 9)
    w3s = w3_oihw[:, :, 0, 0] * s3[:, None]                  # (c2, c_mid)

    # One packed constant slab: [ w1 | dw taps | w3 | shifts ] — single DMA.
    rows = max(c_mid, c2)
    cols = c1 + 9 + c_mid + 3
    const = jnp.zeros((rows, cols), jnp.float32)
    const = const.at[:c_mid, 0:c1].set(w1s)
    const = const.at[:c_mid, c1:c1 + 9].set(wdw_s)
    const = const.at[:c2, c1 + 9:c1 + 9 + c_mid].set(w3s)
    const = const.at[:c_mid, c1 + 9 + c_mid + 0].set(sh1)
    const = const.at[:c_mid, c1 + 9 + c_mid + 1].set(sh2)
    const = const.at[:c2, c1 + 9 + c_mid + 2].set(sh3)
    return torch_params, const


def reference_nchw(x, p, residual):
    """Pure-JAX NCHW reference matching the PyTorch module in eval mode."""
    def bn(y, stats, eps=1e-5):
        g, b, m, v = stats
        return g[None, :, None, None] * (y - m[None, :, None, None]) / \
            jnp.sqrt(v[None, :, None, None] + eps) + b[None, :, None, None]

    dn = ('NCHW', 'OIHW', 'NCHW')
    y = lax.conv_general_dilated(x, p['w1'], (1, 1), 'VALID',
                                 dimension_numbers=dn)
    y = y + p['b1'][None, :, None, None]
    y = _relu6(bn(y, p['bn1']))

    c_mid = p['wdw'].shape[0]
    y = lax.conv_general_dilated(y, p['wdw'], (1, 1), ((1, 1), (1, 1)),
                                 dimension_numbers=dn,
                                 feature_group_count=c_mid)
    y = y + p['b2'][None, :, None, None]
    y = _relu6(bn(y, p['bn2']))

    y = lax.conv_general_dilated(y, p['w3'], (1, 1), 'VALID',
                                 dimension_numbers=dn)
    y = y + p['b3'][None, :, None, None]
    y = bn(y, p['bn3'])
    return x + y if residual else y


if __name__ == "__main__":
    # InvertedBottleneck(c1=8, c2=8, k=3, e=16, act='RE', stride=1, pw=True)
    c1, c2, c_mid = 8, 8, 16
    N, H, W = 2, 16, 16
    residual = (c1 == c2)  # stride == 1

    key = jax.random.PRNGKey(0)
    kx, kp = jax.random.split(key)
    x_nchw = jax.random.normal(kx, (N, c1, H, W), dtype=jnp.float32)

    torch_params, const = make_params(kp, c1, c2, c_mid)

    out_nchw = inverted_bottleneck_pallas(x_nchw, const, (c1, c_mid, c2),
                                          residual=residual)
    out_nchw = jax.block_until_ready(out_nchw)

    # Sanity-check against pure-JAX NCHW reference
    ref = reference_nchw(x_nchw, torch_params, residual)
    assert out_nchw.shape == ref.shape == (N, c2, H, W)
    err = float(jnp.max(jnp.abs(out_nchw - ref)))
    assert jnp.allclose(out_nchw, ref, atol=1e-4, rtol=1e-4), err

    # bf16 I/O path: halves HBM bytes, compute stays f32 inside the kernel.
    out_bf16 = inverted_bottleneck_pallas(x_nchw.astype(jnp.bfloat16), const,
                                          (c1, c_mid, c2), residual=residual)
    out_bf16 = jax.block_until_ready(out_bf16)
    assert out_bf16.shape == (N, c2, H, W)
    assert bool(jnp.all(jnp.isfinite(out_bf16.astype(jnp.float32))))

    print("KERNEL_OK")
</pallas_src>

<mosaic_0001>
module attributes {stable_mosaic.version = 11 : i64} {
  func.func @inverted_bottleneck_kernel(%arg0: i32, %arg1: memref<8x512xf32, #tpu.memory_space<vmem>>, %arg2: memref<16x36xf32, #tpu.memory_space<vmem>>, %arg3: memref<4x512xf32, #tpu.memory_space<vmem>>, %arg4: memref<8x512xf32, #tpu.memory_space<vmem>>) attributes {dimension_semantics = [#tpu.dimension_semantics<parallel>], iteration_bounds = array<i64: 1>, scalar_prefetch = 0 : i64, scratch_operands = 0 : i64, tpu.core_type = #tpu.core_type<tc>, window_params = [{transform_indices = @transform_0, window_bounds = array<i64: 8, 512>}, {pipeline_mode = #tpu.pipeline_mode<synchronous>, transform_indices = @transform_1, window_bounds = array<i64: 16, 36>}, {pipeline_mode = #tpu.pipeline_mode<synchronous>, transform_indices = @transform_2, window_bounds = array<i64: 4, 512>}, {transform_indices = @transform_3, window_bounds = array<i64: 8, 512>}]} {
    %c0 = arith.constant 0 : index
    %c0_0 = arith.constant 0 : index
    %0 = vector.load %arg1[%c0, %c0_0] : memref<8x512xf32, #tpu.memory_space<vmem>>, vector<8x512xf32>
    %c0_1 = arith.constant 0 : index
    %c0_2 = arith.constant 0 : index
    %1 = vector.load %arg2[%c0_1, %c0_2] : memref<16x36xf32, #tpu.memory_space<vmem>>, vector<16x8xf32>
    %c0_3 = arith.constant 0 : index
    %c17 = arith.constant 17 : index
    %2 = vector.load %arg2[%c0_3, %c17] : memref<16x36xf32, #tpu.memory_space<vmem>>, vector<8x16xf32>
    %c0_4 = arith.constant 0 : index
    %c33 = arith.constant 33 : index
    %3 = vector.load %arg2[%c0_4, %c33] : memref<16x36xf32, #tpu.memory_space<vmem>>, vector<16x1xf32>
    %c0_5 = arith.constant 0 : index
    %c34 = arith.constant 34 : index
    %4 = vector.load %arg2[%c0_5, %c34] : memref<16x36xf32, #tpu.memory_space<vmem>>, vector<16x1xf32>
    %c0_6 = arith.constant 0 : index
    %c35 = arith.constant 35 : index
    %5 = vector.load %arg2[%c0_6, %c35] : memref<16x36xf32, #tpu.memory_space<vmem>>, vector<8x1xf32>
    %6 = vector.extract_strided_slice %1 {offsets = [0, 0], sizes = [16, 1], strides = [1, 1]} : vector<16x8xf32> to vector<16x1xf32>
    %7 = vector.extract_strided_slice %0 {offsets = [0, 0], sizes = [1, 512], strides = [1, 1]} : vector<8x512xf32> to vector<1x512xf32>
    %8 = vector.broadcast %6 : vector<16x1xf32> to vector<16x512xf32>
    %9 = vector.broadcast %7 : vector<1x512xf32> to vector<16x512xf32>
    %10 = arith.mulf %8, %9 : vector<16x512xf32>
    %11 = vector.extract_strided_slice %1 {offsets = [0, 1], sizes = [16, 1], strides = [1, 1]} : vector<16x8xf32> to vector<16x1xf32>
    %12 = vector.extract_strided_slice %0 {offsets = [1, 0], sizes = [1, 512], strides = [1, 1]} : vector<8x512xf32> to vector<1x512xf32>
    %13 = vector.broadcast %11 : vector<16x1xf32> to vector<16x512xf32>
    %14 = vector.broadcast %12 : vector<1x512xf32> to vector<16x512xf32>
    %15 = arith.mulf %13, %14 : vector<16x512xf32>
    %16 = arith.addf %10, %15 : vector<16x512xf32>
    %17 = vector.extract_strided_slice %1 {offsets = [0, 2], sizes = [16, 1], strides = [1, 1]} : vector<16x8xf32> to vector<16x1xf32>
    %18 = vector.extract_strided_slice %0 {offsets = [2, 0], sizes = [1, 512], strides = [1, 1]} : vector<8x512xf32> to vector<1x512xf32>
    %19 = vector.broadcast %17 : vector<16x1xf32> to vector<16x512xf32>
    %20 = vector.broadcast %18 : vector<1x512xf32> to vector<16x512xf32>
    %21 = arith.mulf %19, %20 : vector<16x512xf32>
    %22 = arith.addf %16, %21 : vector<16x512xf32>
    %23 = vector.extract_strided_slice %1 {offsets = [0, 3], sizes = [16, 1], strides = [1, 1]} : vector<16x8xf32> to vector<16x1xf32>
    %24 = vector.extract_strided_slice %0 {offsets = [3, 0], sizes = [1, 512], strides = [1, 1]} : vector<8x512xf32> to vector<1x512xf32>
    %25 = vector.broadcast %23 : vector<16x1xf32> to vector<16x512xf32>
    %26 = vector.broadcast %24 : vector<1x512xf32> to vector<16x512xf32>
    %27 = arith.mulf %25, %26 : vector<16x512xf32>
    %28 = arith.addf %22, %27 : vector<16x512xf32>
    %29 = vector.extract_strided_slice %1 {offsets = [0, 4], sizes = [16, 1], strides = [1, 1]} : vector<16x8xf32> to vector<16x1xf32>
    %30 = vector.extract_strided_slice %0 {offsets = [4, 0], sizes = [1, 512], strides = [1, 1]} : vector<8x512xf32> to vector<1x512xf32>
    %31 = vector.broadcast %29 : vector<16x1xf32> to vector<16x512xf32>
    %32 = vector.broadcast %30 : vector<1x512xf32> to vector<16x512xf32>
    %33 = arith.mulf %31, %32 : vector<16x512xf32>
    %34 = arith.addf %28, %33 : vector<16x512xf32>
    %35 = vector.extract_strided_slice %1 {offsets = [0, 5], sizes = [16, 1], strides = [1, 1]} : vector<16x8xf32> to vector<16x1xf32>
    %36 = vector.extract_strided_slice %0 {offsets = [5, 0], sizes = [1, 512], strides = [1, 1]} : vector<8x512xf32> to vector<1x512xf32>
    %37 = vector.broadcast %35 : vector<16x1xf32> to vector<16x512xf32>
    %38 = vector.broadcast %36 : vector<1x512xf32> to vector<16x512xf32>
    %39 = arith.mulf %37, %38 : vector<16x512xf32>
    %40 = arith.addf %34, %39 : vector<16x512xf32>
    %41 = vector.extract_strided_slice %1 {offsets = [0, 6], sizes = [16, 1], strides = [1, 1]} : vector<16x8xf32> to vector<16x1xf32>
    %42 = vector.extract_strided_slice %0 {offsets = [6, 0], sizes = [1, 512], strides = [1, 1]} : vector<8x512xf32> to vector<1x512xf32>
    %43 = vector.broadcast %41 : vector<16x1xf32> to vector<16x512xf32>
    %44 = vector.broadcast %42 : vector<1x512xf32> to vector<16x512xf32>
    %45 = arith.mulf %43, %44 : vector<16x512xf32>
    %46 = arith.addf %40, %45 : vector<16x512xf32>
    %47 = vector.extract_strided_slice %1 {offsets = [0, 7], sizes = [16, 1], strides = [1, 1]} : vector<16x8xf32> to vector<16x1xf32>
    %48 = vector.extract_strided_slice %0 {offsets = [7, 0], sizes = [1, 512], strides = [1, 1]} : vector<8x512xf32> to vector<1x512xf32>
    %49 = vector.broadcast %47 : vector<16x1xf32> to vector<16x512xf32>
    %50 = vector.broadcast %48 : vector<1x512xf32> to vector<16x512xf32>
    %51 = arith.mulf %49, %50 : vector<16x512xf32>
    %52 = arith.addf %46, %51 : vector<16x512xf32>
    %53 = vector.broadcast %3 : vector<16x1xf32> to vector<16x512xf32>
    %54 = arith.addf %52, %53 : vector<16x512xf32>
    %cst = arith.constant 0.000000e+00 : f32
    %55 = vector.broadcast %cst : f32 to vector<16x512xf32>
    %56 = arith.maximumf %54, %55 : vector<16x512xf32>
    %cst_7 = arith.constant 6.000000e+00 : f32
    %57 = vector.broadcast %cst_7 : f32 to vector<16x512xf32>
    %58 = arith.minimumf %56, %57 : vector<16x512xf32>
    %c0_8 = arith.constant 0 : index
    %c0_9 = arith.constant 0 : index
    %59 = vector.load %arg3[%c0_8, %c0_9] : memref<4x512xf32, #tpu.memory_space<vmem>>, vector<1x512xf32>
    %cst_10 = arith.constant 0.000000e+00 : f32
    %60 = vector.broadcast %cst_10 : f32 to vector<1x512xf32>
    %61 = arith.cmpf ogt, %59, %60 : vector<1x512xf32>
    %c1 = arith.constant 1 : index
    %c0_11 = arith.constant 0 : index
    %62 = vector.load %arg3[%c1, %c0_11] : memref<4x512xf32, #tpu.memory_space<vmem>>, vector<1x512xf32>
    %cst_12 = arith.constant 0.000000e+00 : f32
    %63 = vector.broadcast %cst_12 : f32 to vector<1x512xf32>
    %64 = arith.cmpf ogt, %62, %63 : vector<1x512xf32>
    %c2 = arith.constant 2 : index
    %c0_13 = arith.constant 0 : index
    %65 = vector.load %arg3[%c2, %c0_13] : memref<4x512xf32, #tpu.memory_space<vmem>>, vector<1x512xf32>
    %cst_14 = arith.constant 0.000000e+00 : f32
    %66 = vector.broadcast %cst_14 : f32 to vector<1x512xf32>
    %67 = arith.cmpf ogt, %65, %66 : vector<1x512xf32>
    %c3 = arith.constant 3 : index
    %c0_15 = arith.constant 0 : index
    %68 = vector.load %arg3[%c3, %c0_15] : memref<4x512xf32, #tpu.memory_space<vmem>>, vector<1x512xf32>
    %cst_16 = arith.constant 0.000000e+00 : f32
    %69 = vector.broadcast %cst_16 : f32 to vector<1x512xf32>
    %70 = arith.cmpf ogt, %68, %69 : vector<1x512xf32>
    %c17_i32 = arith.constant 17 : i32
    %71 = tpu.dynamic_rotate %58 by %c17_i32 dim 1 : vector<16x512xf32>, i32 -> vector<16x512xf32>
    %72 = arith.andi %61, %67 : vector<1x512xi1>
    %cst_17 = arith.constant 0.000000e+00 : f32
    %73 = vector.shape_cast %72 : vector<1x512xi1> to vector<1x512xi1>
    %74 = vector.broadcast %73 : vector<1x512xi1> to vector<16x512xi1>
    %75 = vector.broadcast %cst_17 : f32 to vector<16x512xf32>
    %76 = arith.select %74, %71, %75 : vector<16x512xi1>, vector<16x512xf32>
    %c0_18 = arith.constant 0 : index
    %c8 = arith.constant 8 : index
    %77 = vector.load %arg2[%c0_18, %c8] : memref<16x36xf32, #tpu.memory_space<vmem>>, vector<16x1xf32>
    %78 = vector.broadcast %77 : vector<16x1xf32> to vector<16x512xf32>
    %79 = arith.mulf %76, %78 : vector<16x512xf32>
    %c16_i32 = arith.constant 16 : i32
    %80 = tpu.dynamic_rotate %58 by %c16_i32 dim 1 : vector<16x512xf32>, i32 -> vector<16x512xf32>
    %cst_19 = arith.constant 0.000000e+00 : f32
    %81 = vector.shape_cast %61 : vector<1x512xi1> to vector<1x512xi1>
    %82 = vector.broadcast %81 : vector<1x512xi1> to vector<16x512xi1>
    %83 = vector.broadcast %cst_19 : f32 to vector<16x512xf32>
    %84 = arith.select %82, %80, %83 : vector<16x512xi1>, vector<16x512xf32>
    %c0_20 = arith.constant 0 : index
    %c9 = arith.constant 9 : index
    %85 = vector.load %arg2[%c0_20, %c9] : memref<16x36xf32, #tpu.memory_space<vmem>>, vector<16x1xf32>
    %86 = vector.broadcast %85 : vector<16x1xf32> to vector<16x512xf32>
    %87 = arith.mulf %84, %86 : vector<16x512xf32>
    %88 = arith.addf %79, %87 : vector<16x512xf32>
    %c15_i32 = arith.constant 15 : i32
    %89 = tpu.dynamic_rotate %58 by %c15_i32 dim 1 : vector<16x512xf32>, i32 -> vector<16x512xf32>
    %90 = arith.andi %61, %70 : vector<1x512xi1>
    %cst_21 = arith.constant 0.000000e+00 : f32
    %91 = vector.shape_cast %90 : vector<1x512xi1> to vector<1x512xi1>
    %92 = vector.broadcast %91 : vector<1x512xi1> to vector<16x512xi1>
    %93 = vector.broadcast %cst_21 : f32 to vector<16x512xf32>
    %94 = arith.select %92, %89, %93 : vector<16x512xi1>, vector<16x512xf32>
    %c0_22 = arith.constant 0 : index
    %c10 = arith.constant 10 : index
    %95 = vector.load %arg2[%c0_22, %c10] : memref<16x36xf32, #tpu.memory_space<vmem>>, vector<16x1xf32>
    %96 = vector.broadcast %95 : vector<16x1xf32> to vector<16x512xf32>
    %97 = arith.mulf %94, %96 : vector<16x512xf32>
    %98 = arith.addf %88, %97 : vector<16x512xf32>
    %c1_i32 = arith.constant 1 : i32
    %99 = tpu.dynamic_rotate %58 by %c1_i32 dim 1 : vector<16x512xf32>, i32 -> vector<16x512xf32>
    %cst_23 = arith.constant 0.000000e+00 : f32
    %100 = vector.shape_cast %67 : vector<1x512xi1> to vector<1x512xi1>
    %101 = vector.broadcast %100 : vector<1x512xi1> to vector<16x512xi1>
    %102 = vector.broadcast %cst_23 : f32 to vector<16x512xf32>
    %103 = arith.select %101, %99, %102 : vector<16x512xi1>, vector<16x512xf32>
    %c0_24 = arith.constant 0 : index
    %c11 = arith.constant 11 : index
    %104 = vector.load %arg2[%c0_24, %c11] : memref<16x36xf32, #tpu.memory_space<vmem>>, vector<16x1xf32>
    %105 = vector.broadcast %104 : vector<16x1xf32> to vector<16x512xf32>
    %106 = arith.mulf %103, %105 : vector<16x512xf32>
    %107 = arith.addf %98, %106 : vector<16x512xf32>
    %c0_25 = arith.constant 0 : index
    %c12 = arith.constant 12 : index
    %108 = vector.load %arg2[%c0_25, %c12] : memref<16x36xf32, #tpu.memory_space<vmem>>, vector<16x1xf32>
    %109 = vector.broadcast %108 : vector<16x1xf32> to vector<16x512xf32>
    %110 = arith.mulf %58, %109 : vector<16x512xf32>
    %111 = arith.addf %107, %110 : vector<16x512xf32>
    %c511_i32 = arith.constant 511 : i32
    %112 = tpu.dynamic_rotate %58 by %c511_i32 dim 1 : vector<16x512xf32>, i32 -> vector<16x512xf32>
    %cst_26 = arith.constant 0.000000e+00 : f32
    %113 = vector.shape_cast %70 : vector<1x512xi1> to vector<1x512xi1>
    %114 = vector.broadcast %113 : vector<1x512xi1> to vector<16x512xi1>
    %115 = vector.broadcast %cst_26 : f32 to vector<16x512xf32>
    %116 = arith.select %114, %112, %115 : vector<16x512xi1>, vector<16x512xf32>
    %c0_27 = arith.constant 0 : index
    %c13 = arith.constant 13 : index
    %117 = vector.load %arg2[%c0_27, %c13] : memref<16x36xf32, #tpu.memory_space<vmem>>, vector<16x1xf32>
    %118 = vector.broadcast %117 : vector<16x1xf32> to vector<16x512xf32>
    %119 = arith.mulf %116, %118 : vector<16x512xf32>
    %120 = arith.addf %111, %119 : vector<16x512xf32>
    %c497_i32 = arith.constant 497 : i32
    %121 = tpu.dynamic_rotate %58 by %c497_i32 dim 1 : vector<16x512xf32>, i32 -> vector<16x512xf32>
    %122 = arith.andi %64, %67 : vector<1x512xi1>
    %cst_28 = arith.constant 0.000000e+00 : f32
    %123 = vector.shape_cast %122 : vector<1x512xi1> to vector<1x512xi1>
    %124 = vector.broadcast %123 : vector<1x512xi1> to vector<16x512xi1>
    %125 = vector.broadcast %cst_28 : f32 to vector<16x512xf32>
    %126 = arith.select %124, %121, %125 : vector<16x512xi1>, vector<16x512xf32>
    %c0_29 = arith.constant 0 : index
    %c14 = arith.constant 14 : index
    %127 = vector.load %arg2[%c0_29, %c14] : memref<16x36xf32, #tpu.memory_space<vmem>>, vector<16x1xf32>
    %128 = vector.broadcast %127 : vector<16x1xf32> to vector<16x512xf32>
    %129 = arith.mulf %126, %128 : vector<16x512xf32>
    %130 = arith.addf %120, %129 : vector<16x512xf32>
    %c496_i32 = arith.constant 496 : i32
    %131 = tpu.dynamic_rotate %58 by %c496_i32 dim 1 : vector<16x512xf32>, i32 -> vector<16x512xf32>
    %cst_30 = arith.constant 0.000000e+00 : f32
    %132 = vector.shape_cast %64 : vector<1x512xi1> to vector<1x512xi1>
    %133 = vector.broadcast %132 : vector<1x512xi1> to vector<16x512xi1>
    %134 = vector.broadcast %cst_30 : f32 to vector<16x512xf32>
    %135 = arith.select %133, %131, %134 : vector<16x512xi1>, vector<16x512xf32>
    %c0_31 = arith.constant 0 : index
    %c15 = arith.constant 15 : index
    %136 = vector.load %arg2[%c0_31, %c15] : memref<16x36xf32, #tpu.memory_space<vmem>>, vector<16x1xf32>
    %137 = vector.broadcast %136 : vector<16x1xf32> to vector<16x512xf32>
    %138 = arith.mulf %135, %137 : vector<16x512xf32>
    %139 = arith.addf %130, %138 : vector<16x512xf32>
    %c495_i32 = arith.constant 495 : i32
    %140 = tpu.dynamic_rotate %58 by %c495_i32 dim 1 : vector<16x512xf32>, i32 -> vector<16x512xf32>
    %141 = arith.andi %64, %70 : vector<1x512xi1>
    %cst_32 = arith.constant 0.000000e+00 : f32
    %142 = vector.shape_cast %141 : vector<1x512xi1> to vector<1x512xi1>
    %143 = vector.broadcast %142 : vector<1x512xi1> to vector<16x512xi1>
    %144 = vector.broadcast %cst_32 : f32 to vector<16x512xf32>
    %145 = arith.select %143, %140, %144 : vector<16x512xi1>, vector<16x512xf32>
    %c0_33 = arith.constant 0 : index
    %c16 = arith.constant 16 : index
    %146 = vector.load %arg2[%c0_33, %c16] : memref<16x36xf32, #tpu.memory_space<vmem>>, vector<16x1xf32>
    %147 = vector.broadcast %146 : vector<16x1xf32> to vector<16x512xf32>
    %148 = arith.mulf %145, %147 : vector<16x512xf32>
    %149 = arith.addf %139, %148 : vector<16x512xf32>
    %150 = vector.broadcast %4 : vector<16x1xf32> to vector<16x512xf32>
    %151 = arith.addf %149, %150 : vector<16x512xf32>
    %cst_34 = arith.constant 0.000000e+00 : f32
    %152 = vector.broadcast %cst_34 : f32 to vector<16x512xf32>
    %153 = arith.maximumf %151, %152 : vector<16x512xf32>
    %cst_35 = arith.constant 6.000000e+00 : f32
    %154 = vector.broadcast %cst_35 : f32 to vector<16x512xf32>
    %155 = arith.minimumf %153, %154 : vector<16x512xf32>
    %156 = vector.extract_strided_slice %2 {offsets = [0, 0], sizes = [8, 1], strides = [1, 1]} : vector<8x16xf32> to vector<8x1xf32>
    %157 = vector.extract_strided_slice %155 {offsets = [0, 0], sizes = [1, 512], strides = [1, 1]} : vector<16x512xf32> to vector<1x512xf32>
    %158 = vector.broadcast %156 : vector<8x1xf32> to vector<8x512xf32>
    %159 = vector.broadcast %157 : vector<1x512xf32> to vector<8x512xf32>
    %160 = arith.mulf %158, %159 : vector<8x512xf32>
    %161 = vector.extract_strided_slice %2 {offsets = [0, 1], sizes = [8, 1], strides = [1, 1]} : vector<8x16xf32> to vector<8x1xf32>
    %162 = vector.extract_strided_slice %155 {offsets = [1, 0], sizes = [1, 512], strides = [1, 1]} : vector<16x512xf32> to vector<1x512xf32>
    %163 = vector.broadcast %161 : vector<8x1xf32> to vector<8x512xf32>
    %164 = vector.broadcast %162 : vector<1x512xf32> to vector<8x512xf32>
    %165 = arith.mulf %163, %164 : vector<8x512xf32>
    %166 = arith.addf %160, %165 : vector<8x512xf32>
    %167 = vector.extract_strided_slice %2 {offsets = [0, 2], sizes = [8, 1], strides = [1, 1]} : vector<8x16xf32> to vector<8x1xf32>
    %168 = vector.extract_strided_slice %155 {offsets = [2, 0], sizes = [1, 512], strides = [1, 1]} : vector<16x512xf32> to vector<1x512xf32>
    %169 = vector.broadcast %167 : vector<8x1xf32> to vector<8x512xf32>
    %170 = vector.broadcast %168 : vector<1x512xf32> to vector<8x512xf32>
    %171 = arith.mulf %169, %170 : vector<8x512xf32>
    %172 = arith.addf %166, %171 : vector<8x512xf32>
    %173 = vector.extract_strided_slice %2 {offsets = [0, 3], sizes = [8, 1], strides = [1, 1]} : vector<8x16xf32> to vector<8x1xf32>
    %174 = vector.extract_strided_slice %155 {offsets = [3, 0], sizes = [1, 512], strides = [1, 1]} : vector<16x512xf32> to vector<1x512xf32>
    %175 = vector.broadcast %173 : vector<8x1xf32> to vector<8x512xf32>
    %176 = vector.broadcast %174 : vector<1x512xf32> to vector<8x512xf32>
    %177 = arith.mulf %175, %176 : vector<8x512xf32>
    %178 = arith.addf %172, %177 : vector<8x512xf32>
    %179 = vector.extract_strided_slice %2 {offsets = [0, 4], sizes = [8, 1], strides = [1, 1]} : vector<8x16xf32> to vector<8x1xf32>
    %180 = vector.extract_strided_slice %155 {offsets = [4, 0], sizes = [1, 512], strides = [1, 1]} : vector<16x512xf32> to vector<1x512xf32>
    %181 = vector.broadcast %179 : vector<8x1xf32> to vector<8x512xf32>
    %182 = vector.broadcast %180 : vector<1x512xf32> to vector<8x512xf32>
    %183 = arith.mulf %181, %182 : vector<8x512xf32>
    %184 = arith.addf %178, %183 : vector<8x512xf32>
    %185 = vector.extract_strided_slice %2 {offsets = [0, 5], sizes = [8, 1], strides = [1, 1]} : vector<8x16xf32> to vector<8x1xf32>
    %186 = vector.extract_strided_slice %155 {offsets = [5, 0], sizes = [1, 512], strides = [1, 1]} : vector<16x512xf32> to vector<1x512xf32>
    %187 = vector.broadcast %185 : vector<8x1xf32> to vector<8x512xf32>
    %188 = vector.broadcast %186 : vector<1x512xf32> to vector<8x512xf32>
    %189 = arith.mulf %187, %188 : vector<8x512xf32>
    %190 = arith.addf %184, %189 : vector<8x512xf32>
    %191 = vector.extract_strided_slice %2 {offsets = [0, 6], sizes = [8, 1], strides = [1, 1]} : vector<8x16xf32> to vector<8x1xf32>
    %192 = vector.extract_strided_slice %155 {offsets = [6, 0], sizes = [1, 512], strides = [1, 1]} : vector<16x512xf32> to vector<1x512xf32>
    %193 = vector.broadcast %191 : vector<8x1xf32> to vector<8x512xf32>
    %194 = vector.broadcast %192 : vector<1x512xf32> to vector<8x512xf32>
    %195 = arith.mulf %193, %194 : vector<8x512xf32>
    %196 = arith.addf %190, %195 : vector<8x512xf32>
    %197 = vector.extract_strided_slice %2 {offsets = [0, 7], sizes = [8, 1], strides = [1, 1]} : vector<8x16xf32> to vector<8x1xf32>
    %198 = vector.extract_strided_slice %155 {offsets = [7, 0], sizes = [1, 512], strides = [1, 1]} : vector<16x512xf32> to vector<1x512xf32>
    %199 = vector.broadcast %197 : vector<8x1xf32> to vector<8x512xf32>
    %200 = vector.broadcast %198 : vector<1x512xf32> to vector<8x512xf32>
    %201 = arith.mulf %199, %200 : vector<8x512xf32>
    %202 = arith.addf %196, %201 : vector<8x512xf32>
    %203 = vector.extract_strided_slice %2 {offsets = [0, 8], sizes = [8, 1], strides = [1, 1]} : vector<8x16xf32> to vector<8x1xf32>
    %204 = vector.extract_strided_slice %155 {offsets = [8, 0], sizes = [1, 512], strides = [1, 1]} : vector<16x512xf32> to vector<1x512xf32>
    %205 = vector.broadcast %203 : vector<8x1xf32> to vector<8x512xf32>
    %206 = vector.broadcast %204 : vector<1x512xf32> to vector<8x512xf32>
    %207 = arith.mulf %205, %206 : vector<8x512xf32>
    %208 = arith.addf %202, %207 : vector<8x512xf32>
    %209 = vector.extract_strided_slice %2 {offsets = [0, 9], sizes = [8, 1], strides = [1, 1]} : vector<8x16xf32> to vector<8x1xf32>
    %210 = vector.extract_strided_slice %155 {offsets = [9, 0], sizes = [1, 512], strides = [1, 1]} : vector<16x512xf32> to vector<1x512xf32>
    %211 = vector.broadcast %209 : vector<8x1xf32> to vector<8x512xf32>
    %212 = vector.broadcast %210 : vector<1x512xf32> to vector<8x512xf32>
    %213 = arith.mulf %211, %212 : vector<8x512xf32>
    %214 = arith.addf %208, %213 : vector<8x512xf32>
    %215 = vector.extract_strided_slice %2 {offsets = [0, 10], sizes = [8, 1], strides = [1, 1]} : vector<8x16xf32> to vector<8x1xf32>
    %216 = vector.extract_strided_slice %155 {offsets = [10, 0], sizes = [1, 512], strides = [1, 1]} : vector<16x512xf32> to vector<1x512xf32>
    %217 = vector.broadcast %215 : vector<8x1xf32> to vector<8x512xf32>
    %218 = vector.broadcast %216 : vector<1x512xf32> to vector<8x512xf32>
    %219 = arith.mulf %217, %218 : vector<8x512xf32>
    %220 = arith.addf %214, %219 : vector<8x512xf32>
    %221 = vector.extract_strided_slice %2 {offsets = [0, 11], sizes = [8, 1], strides = [1, 1]} : vector<8x16xf32> to vector<8x1xf32>
    %222 = vector.extract_strided_slice %155 {offsets = [11, 0], sizes = [1, 512], strides = [1, 1]} : vector<16x512xf32> to vector<1x512xf32>
    %223 = vector.broadcast %221 : vector<8x1xf32> to vector<8x512xf32>
    %224 = vector.broadcast %222 : vector<1x512xf32> to vector<8x512xf32>
    %225 = arith.mulf %223, %224 : vector<8x512xf32>
    %226 = arith.addf %220, %225 : vector<8x512xf32>
    %227 = vector.extract_strided_slice %2 {offsets = [0, 12], sizes = [8, 1], strides = [1, 1]} : vector<8x16xf32> to vector<8x1xf32>
    %228 = vector.extract_strided_slice %155 {offsets = [12, 0], sizes = [1, 512], strides = [1, 1]} : vector<16x512xf32> to vector<1x512xf32>
    %229 = vector.broadcast %227 : vector<8x1xf32> to vector<8x512xf32>
    %230 = vector.broadcast %228 : vector<1x512xf32> to vector<8x512xf32>
    %231 = arith.mulf %229, %230 : vector<8x512xf32>
    %232 = arith.addf %226, %231 : vector<8x512xf32>
    %233 = vector.extract_strided_slice %2 {offsets = [0, 13], sizes = [8, 1], strides = [1, 1]} : vector<8x16xf32> to vector<8x1xf32>
    %234 = vector.extract_strided_slice %155 {offsets = [13, 0], sizes = [1, 512], strides = [1, 1]} : vector<16x512xf32> to vector<1x512xf32>
    %235 = vector.broadcast %233 : vector<8x1xf32> to vector<8x512xf32>
    %236 = vector.broadcast %234 : vector<1x512xf32> to vector<8x512xf32>
    %237 = arith.mulf %235, %236 : vector<8x512xf32>
    %238 = arith.addf %232, %237 : vector<8x512xf32>
    %239 = vector.extract_strided_slice %2 {offsets = [0, 14], sizes = [8, 1], strides = [1, 1]} : vector<8x16xf32> to vector<8x1xf32>
    %240 = vector.extract_strided_slice %155 {offsets = [14, 0], sizes = [1, 512], strides = [1, 1]} : vector<16x512xf32> to vector<1x512xf32>
    %241 = vector.broadcast %239 : vector<8x1xf32> to vector<8x512xf32>
    %242 = vector.broadcast %240 : vector<1x512xf32> to vector<8x512xf32>
    %243 = arith.mulf %241, %242 : vector<8x512xf32>
    %244 = arith.addf %238, %243 : vector<8x512xf32>
    %245 = vector.extract_strided_slice %2 {offsets = [0, 15], sizes = [8, 1], strides = [1, 1]} : vector<8x16xf32> to vector<8x1xf32>
    %246 = vector.extract_strided_slice %155 {offsets = [15, 0], sizes = [1, 512], strides = [1, 1]} : vector<16x512xf32> to vector<1x512xf32>
    %247 = vector.broadcast %245 : vector<8x1xf32> to vector<8x512xf32>
    %248 = vector.broadcast %246 : vector<1x512xf32> to vector<8x512xf32>
    %249 = arith.mulf %247, %248 : vector<8x512xf32>
    %250 = arith.addf %244, %249 : vector<8x512xf32>
    %251 = vector.broadcast %5 : vector<8x1xf32> to vector<8x512xf32>
    %252 = arith.addf %250, %251 : vector<8x512xf32>
    %253 = arith.addf %252, %0 : vector<8x512xf32>
    %c0_36 = arith.constant 0 : index
    %c0_37 = arith.constant 0 : index
    %254 = vector.load %arg4[%c0_36, %c0_37] : memref<8x512xf32, #tpu.memory_space<vmem>>, vector<8x512xf32>
    tpu.vector_store %arg4[%c0_36, %c0_37], %253 {strides = array<i32>} : memref<8x512xf32, #tpu.memory_space<vmem>>, vector<8x512xf32>,
    return
  }
  func.func @transform_0(%arg0: i32) -> (i32, i32) {
    %c0_i32 = arith.constant 0 : i32
    %c0_i32_0 = arith.constant 0 : i32
    return %c0_i32, %arg0 : i32, i32
  }
  func.func @transform_1(%arg0: i32) -> (i32, i32) {
    %c0_i32 = arith.constant 0 : i32
    %c0_i32_0 = arith.constant 0 : i32
    %c0_i32_1 = arith.constant 0 : i32
    return %c0_i32, %c0_i32_0 : i32, i32
  }
  func.func @transform_2(%arg0: i32) -> (i32, i32) {
    %c0_i32 = arith.constant 0 : i32
    %c0_i32_0 = arith.constant 0 : i32
    %c0_i32_1 = arith.constant 0 : i32
    return %c0_i32, %c0_i32_0 : i32, i32
  }
  func.func @transform_3(%arg0: i32) -> (i32, i32) {
    %c0_i32 = arith.constant 0 : i32
    %c0_i32_0 = arith.constant 0 : i32
    return %c0_i32, %arg0 : i32, i32
  }
}

</mosaic_0001>

<llo_original>
// kernel: tpu_custom_call.1
$region0: #{tpu_custom_call.1}
  #allocation0 [shape = 'u32[]', space=smem, size = 0x4, offset = 0x4, fixed_abs, tag = 'smem constant byte address 0x4 - core index']
  #allocation1 [shape = 'u32[144,128]{1,0:T(1,128)}', space=vmem, size = 0x12000, scoped, tag = 'internal scratch']
  %s0 = inlined_call_operand.hbm [shape: f32[8,512], index: 0, kind: input, shape index: {}]
  %s1 = inlined_call_operand.hbm [shape: f32[16,36], index: 1, kind: input, shape index: {}]
  %s2 = inlined_call_operand.hbm [shape: f32[4,512], index: 2, kind: input, shape index: {}]
  %s3 = inlined_call_operand.hbm [shape: f32[8,512], index: 3, kind: output, shape index: {}]
  %s4 = sld [smem:[#allocation0]]
  $region34: #{tpu_custom_call.1} parent=0
    _
  %s6 = ssub.s32 1, %s4
  %s7 = scalar_select 0, %s6, %s4
  $region1: #{tpu_custom_call.1} parent=0
    #allocation2 [shape = 'u8[16384]{0}', space=vmem, size = 0x4000, scoped, tag = 'input window, operand 0, single buffered']
    #allocation3 [shape = 's32[1]{0}', space=sflag, size = 0x4, scoped, tag = 'scoped memory for tpu_custom_call.1']
    #allocation4 [shape = 's32[1]{0}', space=sflag, size = 0x4, scoped, tag = 'scoped memory for tpu_custom_call.1']
    #allocation5 [shape = 'u8[8192]{0}', space=vmem, size = 0x2000, scoped, tag = 'input window, operand 1, single buffered']
    #allocation6 [shape = 's32[1]{0}', space=sflag, size = 0x4, scoped, tag = 'scoped memory for tpu_custom_call.1']
    #allocation7 [shape = 'u8[8192]{0}', space=vmem, size = 0x2000, scoped, tag = 'input window, operand 2, single buffered']
    #allocation8 [shape = 'u8[16384]{0}', space=vmem, size = 0x4000, scoped, tag = 'output window, operand 0, single buffered']
    %8 = vsyncpa [#allocation3], 0
    %9 = vsyncpa [#allocation6], 0
    %10 = vsyncpa [#allocation4], 0
    // Predicated region
    $region2: #{tpu_custom_call.1} parent=1 // pred_check
      _
    $region3: #{tpu_custom_call.1} parent=1 // pred_check_branch
      %12 = sbr.rel (0) target = $region5
    $region4: #{tpu_custom_call.1} parent=1 // pred_region
      %s14 = ssub.s32 512, 512
      %15 = vsyncadd [#allocation3], %s14
      %s17 = sshll.u32 [#allocation2], 4
      %s18 = int_to_ptr.vmem [resolvable:$true] %s17
      %20 = dma.hbm_to_vmem [thread:$0]  %s0, 512, %s18, [#allocation3]
    $region5: #{tpu_custom_call.1} parent=1 // pred_fallthru
      _
    // Predicated region
    $region6: #{tpu_custom_call.1} parent=1 // pred_check
      _
    $region7: #{tpu_custom_call.1} parent=1 // pred_check_branch
      %22 = sbr.rel (0) target = $region9
    $region8: #{tpu_custom_call.1} parent=1 // pred_region
      %s24 = ssub.s32 256, 256
      %25 = vsyncadd [#allocation6], %s24
      %s26 = sshll.u32 [#allocation5], 4
      %s27 = int_to_ptr.vmem [resolvable:$true] %s26
      %32 = dma.hbm_to_vmem [thread:$0]  %s1, 256, %s27, [#allocation6], 128, 128, 8
    $region9: #{tpu_custom_call.1} parent=1 // pred_fallthru
      _
    // Predicated region
    $region10: #{tpu_custom_call.1} parent=1 // pred_check
      _
    $region11: #{tpu_custom_call.1} parent=1 // pred_check_branch
      %34 = sbr.rel (0) target = $region13
    $region12: #{tpu_custom_call.1} parent=1 // pred_region
      %s36 = ssub.s32 256, 256
      %37 = vsyncadd [#allocation6], %s36
      %s39 = sshll.u32 [#allocation7], 4
      %s40 = int_to_ptr.vmem [resolvable:$true] %s39
      %42 = dma.hbm_to_vmem [thread:$0]  %s2, 256, %s40, [#allocation6]
    $region13: #{tpu_custom_call.1} parent=1 // pred_fallthru
      _
    // Predicated region
    $region14: #{tpu_custom_call.1} parent=1 // pred_check
      _
    $region15: #{tpu_custom_call.1} parent=1 // pred_check_branch
      %44 = sbr.rel (0) target = $region17
    $region16: #{tpu_custom_call.1} parent=1 // pred_region
      %45 = dma.done [#allocation3], 512
    $region17: #{tpu_custom_call.1} parent=1 // pred_fallthru
      _
    // Predicated region
    $region18: #{tpu_custom_call.1} parent=1 // pred_check
      _
    $region19: #{tpu_custom_call.1} parent=1 // pred_check_branch
      %47 = sbr.rel (0) target = $region21
    $region20: #{tpu_custom_call.1} parent=1 // pred_region
      %48 = dma.done [#allocation6], 256
    $region21: #{tpu_custom_call.1} parent=1 // pred_fallthru
      _
    // Predicated region
    $region22: #{tpu_custom_call.1} parent=1 // pred_check
      _
    $region23: #{tpu_custom_call.1} parent=1 // pred_check_branch
      %50 = sbr.rel (0) target = $region25
    $region24: #{tpu_custom_call.1} parent=1 // pred_region
      %51 = dma.done [#allocation6], 256
    $region25: #{tpu_custom_call.1} parent=1 // pred_fallthru
      _
    %v52 = vld [vmem:[#allocation2] sm:$0xff]
    %v53 = vld [vmem:[#allocation2 + $0x8] sm:$0xff]
    %v54 = vld [vmem:[#allocation2 + $0x10] sm:$0xff]
    %v55 = vld [vmem:[#allocation2 + $0x18] sm:$0xff]
    %v56 = vld [vmem:[#allocation5] sm:$0xff]
    %v57 = vld [vmem:[#allocation5 + $0x8] sm:$0xff]
    %59 = vset.pattern.permute.xlu0 0
    %60 = vperm.xlu0 %59, %v56
    %v61 = vpop.permute.xlu0 %60
    %64 = vset.pattern.permute.xlu0 0
    %65 = vperm.xlu0 %64, %v57
    %v66 = vpop.permute.xlu0 %65
    %v68 = vlaneseq
    %v69 = vshrl.u32 %v68, 7
    %v70 = vsub.s32 0, %v69
    %v71 = vrot.slane %v52, %v70
    %v72 = vlaneseq
    %v73 = vshrl.u32 %v72, 7
    %v74 = vsub.s32 0, %v73
    %v75 = vrot.slane %v53, %v74
    %v76 = vlaneseq
    %v77 = vshrl.u32 %v76, 7
    %v78 = vsub.s32 0, %v77
    %v79 = vrot.slane %v54, %v78
    %v80 = vlaneseq
    %v81 = vshrl.u32 %v80, 7
    %v82 = vsub.s32 0, %v81
    %v83 = vrot.slane %v55, %v82
    %v84 = vmul.f32 %v61, %v71
    %v85 = vmul.f32 %v61, %v75
    %v86 = vmul.f32 %v61, %v79
    %v87 = vmul.f32 %v61, %v83
    %v88 = vmul.f32 %v66, %v71
    %v89 = vmul.f32 %v66, %v75
    %v90 = vmul.f32 %v66, %v79
    %v91 = vmul.f32 %v66, %v83
    %92 = vset.pattern.permute.xlu0 1
    %93 = vperm.xlu0 %92, %v56
    %v94 = vpop.permute.xlu0 %93
    %96 = vset.pattern.permute.xlu0 1
    %97 = vperm.xlu0 %96, %v57
    %v98 = vpop.permute.xlu0 %97
    %v100 = vlaneseq
    %v101 = vshrl.u32 %v100, 7
    %v102 = vsub.s32 1, %v101
    %v103 = vrot.slane %v52, %v102
    %v104 = vlaneseq
    %v105 = vshrl.u32 %v104, 7
    %v106 = vsub.s32 1, %v105
    %v107 = vrot.slane %v53, %v106
    %v108 = vlaneseq
    %v109 = vshrl.u32 %v108, 7
    %v110 = vsub.s32 1, %v109
    %v111 = vrot.slane %v54, %v110
    %v112 = vlaneseq
    %v113 = vshrl.u32 %v112, 7
    %v114 = vsub.s32 1, %v113
    %v115 = vrot.slane %v55, %v114
    %v116 = vmul.f32 %v94, %v103
    %v117 = vmul.f32 %v94, %v107
    %v118 = vmul.f32 %v94, %v111
    %v119 = vmul.f32 %v94, %v115
    %v120 = vmul.f32 %v98, %v103
    %v121 = vmul.f32 %v98, %v107
    %v122 = vmul.f32 %v98, %v111
    %v123 = vmul.f32 %v98, %v115
    %v124 = vadd.f32 %v84, %v116
    %v125 = vadd.f32 %v85, %v117
    %v126 = vadd.f32 %v86, %v118
    %v127 = vadd.f32 %v87, %v119
    %v128 = vadd.f32 %v88, %v120
    %v129 = vadd.f32 %v89, %v121
    %v130 = vadd.f32 %v90, %v122
    %v131 = vadd.f32 %v91, %v123
    %132 = vset.pattern.permute.xlu0 2
    %133 = vperm.xlu0 %132, %v56
    %v134 = vpop.permute.xlu0 %133
    %136 = vset.pattern.permute.xlu0 2
    %137 = vperm.xlu0 %136, %v57
    %v138 = vpop.permute.xlu0 %137
    %v140 = vlaneseq
    %v141 = vshrl.u32 %v140, 7
    %v142 = vsub.s32 2, %v141
    %v143 = vrot.slane %v52, %v142
    %v144 = vlaneseq
    %v145 = vshrl.u32 %v144, 7
    %v146 = vsub.s32 2, %v145
    %v147 = vrot.slane %v53, %v146
    %v148 = vlaneseq
    %v149 = vshrl.u32 %v148, 7
    %v150 = vsub.s32 2, %v149
    %v151 = vrot.slane %v54, %v150
    %v152 = vlaneseq
    %v153 = vshrl.u32 %v152, 7
    %v154 = vsub.s32 2, %v153
    %v155 = vrot.slane %v55, %v154
    %v156 = vmul.f32 %v134, %v143
    %v157 = vmul.f32 %v134, %v147
    %v158 = vmul.f32 %v134, %v151
    %v159 = vmul.f32 %v134, %v155
    %v160 = vmul.f32 %v138, %v143
    %v161 = vmul.f32 %v138, %v147
    %v162 = vmul.f32 %v138, %v151
    %v163 = vmul.f32 %v138, %v155
    %v164 = vadd.f32 %v124, %v156
    %v165 = vadd.f32 %v125, %v157
    %v166 = vadd.f32 %v126, %v158
    %v167 = vadd.f32 %v127, %v159
    %v168 = vadd.f32 %v128, %v160
    %v169 = vadd.f32 %v129, %v161
    %v170 = vadd.f32 %v130, %v162
    %v171 = vadd.f32 %v131, %v163
    %172 = vset.pattern.permute.xlu0 3
    %173 = vperm.xlu0 %172, %v56
    %v174 = vpop.permute.xlu0 %173
    %176 = vset.pattern.permute.xlu0 3
    %177 = vperm.xlu0 %176, %v57
    %v178 = vpop.permute.xlu0 %177
    %v180 = vlaneseq
    %v181 = vshrl.u32 %v180, 7
    %v182 = vsub.s32 3, %v181
    %v183 = vrot.slane %v52, %v182
    %v184 = vlaneseq
    %v185 = vshrl.u32 %v184, 7
    %v186 = vsub.s32 3, %v185
    %v187 = vrot.slane %v53, %v186
    %v188 = vlaneseq
    %v189 = vshrl.u32 %v188, 7
    %v190 = vsub.s32 3, %v189
    %v191 = vrot.slane %v54, %v190
    %v192 = vlaneseq
    %v193 = vshrl.u32 %v192, 7
    %v194 = vsub.s32 3, %v193
    %v195 = vrot.slane %v55, %v194
    %v196 = vmul.f32 %v174, %v183
    %v197 = vmul.f32 %v174, %v187
    %v198 = vmul.f32 %v174, %v191
    %v199 = vmul.f32 %v174, %v195
    %v200 = vmul.f32 %v178, %v183
    %v201 = vmul.f32 %v178, %v187
    %v202 = vmul.f32 %v178, %v191
    %v203 = vmul.f32 %v178, %v195
    %v204 = vadd.f32 %v164, %v196
    %v205 = vadd.f32 %v165, %v197
    %v206 = vadd.f32 %v166, %v198
    %v207 = vadd.f32 %v167, %v199
    %v208 = vadd.f32 %v168, %v200
    %v209 = vadd.f32 %v169, %v201
    %v210 = vadd.f32 %v170, %v202
    %v211 = vadd.f32 %v171, %v203
    %212 = vset.pattern.permute.xlu0 4
    %213 = vperm.xlu0 %212, %v56
    %v214 = vpop.permute.xlu0 %213
    %216 = vset.pattern.permute.xlu0 4
    %217 = vperm.xlu0 %216, %v57
    %v218 = vpop.permute.xlu0 %217
    %v220 = vlaneseq
    %v221 = vshrl.u32 %v220, 7
    %v222 = vsub.s32 4, %v221
    %v223 = vrot.slane %v52, %v222
    %v224 = vlaneseq
    %v225 = vshrl.u32 %v224, 7
    %v226 = vsub.s32 4, %v225
    %v227 = vrot.slane %v53, %v226
    %v228 = vlaneseq
    %v229 = vshrl.u32 %v228, 7
    %v230 = vsub.s32 4, %v229
    %v231 = vrot.slane %v54, %v230
    %v232 = vlaneseq
    %v233 = vshrl.u32 %v232, 7
    %v234 = vsub.s32 4, %v233
    %v235 = vrot.slane %v55, %v234
    %v236 = vmul.f32 %v214, %v223
    %v237 = vmul.f32 %v214, %v227
    %v238 = vmul.f32 %v214, %v231
    %v239 = vmul.f32 %v214, %v235
    %v240 = vmul.f32 %v218, %v223
    %v241 = vmul.f32 %v218, %v227
    %v242 = vmul.f32 %v218, %v231
    %v243 = vmul.f32 %v218, %v235
    %v244 = vadd.f32 %v204, %v236
    %v245 = vadd.f32 %v205, %v237
    %v246 = vadd.f32 %v206, %v238
    %v247 = vadd.f32 %v207, %v239
    %v248 = vadd.f32 %v208, %v240
    %v249 = vadd.f32 %v209, %v241
    %v250 = vadd.f32 %v210, %v242
    %v251 = vadd.f32 %v211, %v243
    %252 = vset.pattern.permute.xlu0 5
    %253 = vperm.xlu0 %252, %v56
    %v254 = vpop.permute.xlu0 %253
    %256 = vset.pattern.permute.xlu0 5
    %257 = vperm.xlu0 %256, %v57
    %v258 = vpop.permute.xlu0 %257
    %v260 = vlaneseq
    %v261 = vshrl.u32 %v260, 7
    %v262 = vsub.s32 5, %v261
    %v263 = vrot.slane %v52, %v262
    %v264 = vlaneseq
    %v265 = vshrl.u32 %v264, 7
    %v266 = vsub.s32 5, %v265
    %v267 = vrot.slane %v53, %v266
    %v268 = vlaneseq
    %v269 = vshrl.u32 %v268, 7
    %v270 = vsub.s32 5, %v269
    %v271 = vrot.slane %v54, %v270
    %v272 = vlaneseq
    %v273 = vshrl.u32 %v272, 7
    %v274 = vsub.s32 5, %v273
    %v275 = vrot.slane %v55, %v274
    %v276 = vmul.f32 %v254, %v263
    %v277 = vmul.f32 %v254, %v267
    %v278 = vmul.f32 %v254, %v271
    %v279 = vmul.f32 %v254, %v275
    %v280 = vmul.f32 %v258, %v263
    %v281 = vmul.f32 %v258, %v267
    %v282 = vmul.f32 %v258, %v271
    %v283 = vmul.f32 %v258, %v275
    %v284 = vadd.f32 %v244, %v276
    %v285 = vadd.f32 %v245, %v277
    %v286 = vadd.f32 %v246, %v278
    %v287 = vadd.f32 %v247, %v279
    %v288 = vadd.f32 %v248, %v280
    %v289 = vadd.f32 %v249, %v281
    %v290 = vadd.f32 %v250, %v282
    %v291 = vadd.f32 %v251, %v283
    %292 = vset.pattern.permute.xlu0 6
    %293 = vperm.xlu0 %292, %v56
    %v294 = vpop.permute.xlu0 %293
    %296 = vset.pattern.permute.xlu0 6
    %297 = vperm.xlu0 %296, %v57
    %v298 = vpop.permute.xlu0 %297
    %v300 = vlaneseq
    %v301 = vshrl.u32 %v300, 7
    %v302 = vsub.s32 6, %v301
    %v303 = vrot.slane %v52, %v302
    %v304 = vlaneseq
    %v305 = vshrl.u32 %v304, 7
    %v306 = vsub.s32 6, %v305
    %v307 = vrot.slane %v53, %v306
    %v308 = vlaneseq
    %v309 = vshrl.u32 %v308, 7
    %v310 = vsub.s32 6, %v309
    %v311 = vrot.slane %v54, %v310
    %v312 = vlaneseq
    %v313 = vshrl.u32 %v312, 7
    %v314 = vsub.s32 6, %v313
    %v315 = vrot.slane %v55, %v314
    %v316 = vmul.f32 %v294, %v303
    %v317 = vmul.f32 %v294, %v307
    %v318 = vmul.f32 %v294, %v311
    %v319 = vmul.f32 %v294, %v315
    %v320 = vmul.f32 %v298, %v303
    %v321 = vmul.f32 %v298, %v307
    %v322 = vmul.f32 %v298, %v311
    %v323 = vmul.f32 %v298, %v315
    %v324 = vadd.f32 %v284, %v316
    %v325 = vadd.f32 %v285, %v317
    %v326 = vadd.f32 %v286, %v318
    %v327 = vadd.f32 %v287, %v319
    %v328 = vadd.f32 %v288, %v320
    %v329 = vadd.f32 %v289, %v321
    %v330 = vadd.f32 %v290, %v322
    %v331 = vadd.f32 %v291, %v323
    %332 = vset.pattern.permute.xlu0 7
    %333 = vperm.xlu0 %332, %v56
    %v334 = vpop.permute.xlu0 %333
    %336 = vset.pattern.permute.xlu0 7
    %337 = vperm.xlu0 %336, %v57
    %v338 = vpop.permute.xlu0 %337
    %v340 = vlaneseq
    %v341 = vshrl.u32 %v340, 7
    %v342 = vsub.s32 7, %v341
    %v343 = vrot.slane %v52, %v342
    %v344 = vlaneseq
    %v345 = vshrl.u32 %v344, 7
    %v346 = vsub.s32 7, %v345
    %v347 = vrot.slane %v53, %v346
    %v348 = vlaneseq
    %v349 = vshrl.u32 %v348, 7
    %v350 = vsub.s32 7, %v349
    %v351 = vrot.slane %v54, %v350
    %v352 = vlaneseq
    %v353 = vshrl.u32 %v352, 7
    %v354 = vsub.s32 7, %v353
    %v355 = vrot.slane %v55, %v354
    %v356 = vmul.f32 %v334, %v343
    %v357 = vmul.f32 %v334, %v347
    %v358 = vmul.f32 %v334, %v351
    %v359 = vmul.f32 %v334, %v355
    %v360 = vmul.f32 %v338, %v343
    %v361 = vmul.f32 %v338, %v347
    %v362 = vmul.f32 %v338, %v351
    %v363 = vmul.f32 %v338, %v355
    %v364 = vadd.f32 %v324, %v356
    %v365 = vadd.f32 %v325, %v357
    %v366 = vadd.f32 %v326, %v358
    %v367 = vadd.f32 %v327, %v359
    %v368 = vadd.f32 %v328, %v360
    %v369 = vadd.f32 %v329, %v361
    %v370 = vadd.f32 %v330, %v362
    %v371 = vadd.f32 %v331, %v363
    %372 = vset.pattern.permute.xlu0 33
    %373 = vperm.xlu0 %372, %v56
    %v374 = vpop.permute.xlu0 %373
    %376 = vset.pattern.permute.xlu0 33
    %377 = vperm.xlu0 %376, %v57
    %v378 = vpop.permute.xlu0 %377
    %v380 = vadd.f32 %v364, %v374
    %v381 = vadd.f32 %v365, %v374
    %v382 = vadd.f32 %v366, %v374
    %v383 = vadd.f32 %v367, %v374
    %v384 = vadd.f32 %v368, %v378
    %v385 = vadd.f32 %v369, %v378
    %v386 = vadd.f32 %v370, %v378
    %v387 = vadd.f32 %v371, %v378
    %v388 = vmax.f32 %v380, 0.0
    %v389 = vmax.f32 %v381, 0.0
    %v390 = vmax.f32 %v382, 0.0
    %v391 = vmax.f32 %v383, 0.0
    %v392 = vmax.f32 %v384, 0.0
    %v393 = vmax.f32 %v385, 0.0
    %v394 = vmax.f32 %v386, 0.0
    %v395 = vmax.f32 %v387, 0.0
    %v396 = vmin.f32 %v388, 6.0
    %v397 = vmin.f32 %v389, 6.0
    %v398 = vmin.f32 %v390, 6.0
    %v399 = vmin.f32 %v391, 6.0
    %v400 = vmin.f32 %v392, 6.0
    %v401 = vmin.f32 %v393, 6.0
    %v402 = vmin.f32 %v394, 6.0
    %v403 = vmin.f32 %v395, 6.0
    %v404 = vld [vmem:[#allocation7] ss:$4 sm:$0xf]
    %vm405 = vcmp.gt.f32.partialorder %v404, 0.0
    %s406 = scalar_lea.vmem [#allocation7], 1
    %v407 = vld [vmem:[%s406] ss:$4 sm:$0xf]
    %vm408 = vcmp.gt.f32.partialorder %v407, 0.0
    %s409 = scalar_lea.vmem [#allocation7], 2
    %v410 = vld [vmem:[%s409] ss:$4 sm:$0xf]
    %vm411 = vcmp.gt.f32.partialorder %v410, 0.0
    %s412 = scalar_lea.vmem [#allocation7], 3
    %v413 = vld [vmem:[%s412] ss:$4 sm:$0xf]
    %vm414 = vcmp.gt.f32.partialorder %v413, 0.0
    %415 = vrot.lane.b32.xlu0 %v396, 17
    %v416 = vpop.permute.xlu0 %415
    %417 = vrot.lane.b32.xlu0 %v400, 17
    %v418 = vpop.permute.xlu0 %417
    %419 = vrot.lane.b32.xlu0 %v397, 17
    %v420 = vpop.permute.xlu0 %419
    %421 = vrot.lane.b32.xlu0 %v401, 17
    %v422 = vpop.permute.xlu0 %421
    %423 = vrot.lane.b32.xlu0 %v398, 17
    %v424 = vpop.permute.xlu0 %423
    %425 = vrot.lane.b32.xlu0 %v402, 17
    %v426 = vpop.permute.xlu0 %425
    %427 = vrot.lane.b32.xlu0 %v399, 17
    %v428 = vpop.permute.xlu0 %427
    %429 = vrot.lane.b32.xlu0 %v403, 17
    %v430 = vpop.permute.xlu0 %429
    %v431 = vlaneseq
    %v432 = vand.u32 %v431, 127
    %vm433 = vcmp.lt.s32.totalorder %v432, 17
    %v434 = vsel %vm433, %v424, %v428
    %v435 = vsel %vm433, %v426, %v430
    %v436 = vsel %vm433, %v420, %v424
    %v437 = vsel %vm433, %v422, %v426
    %v438 = vsel %vm433, %v416, %v420
    %v439 = vsel %vm433, %v418, %v422
    %v440 = vsel %vm433, %v428, %v416
    %v441 = vsel %vm433, %v430, %v418
    %vm442 = vmand %vm405, %vm411
    %v443 = vsel %vm442, 1, 0
    %v444 = vlaneseq
    %v445 = vshrl.u32 %v444, 7
    %v446 = vsub.s32 0, %v445
    %v447 = vrot.slane %v443, %v446
    %v448 = vlaneseq
    %v449 = vshrl.u32 %v448, 7
    %v450 = vsub.s32 1, %v449
    %v451 = vrot.slane %v443, %v450
    %v452 = vlaneseq
    %v453 = vshrl.u32 %v452, 7
    %v454 = vsub.s32 2, %v453
    %v455 = vrot.slane %v443, %v454
    %v456 = vlaneseq
    %v457 = vshrl.u32 %v456, 7
    %v458 = vsub.s32 3, %v457
    %v459 = vrot.slane %v443, %v458
    %vm460 = vcmp.eq.s32.totalorder %v447, 1
    %vm461 = vcmp.eq.s32.totalorder %v451, 1
    %vm462 = vcmp.eq.s32.totalorder %v455, 1
    %vm463 = vcmp.eq.s32.totalorder %v459, 1
    %v464 = vsel %vm460, %v440, 0.0
    %v465 = vsel %vm461, %v438, 0.0
    %v466 = vsel %vm462, %v436, 0.0
    %v467 = vsel %vm463, %v434, 0.0
    %v468 = vsel %vm460, %v441, 0.0
    %v469 = vsel %vm461, %v439, 0.0
    %v470 = vsel %vm462, %v437, 0.0
    %v471 = vsel %vm463, %v435, 0.0
    %472 = vset.pattern.permute.xlu0 8
    %473 = vperm.xlu0 %472, %v56
    %v474 = vpop.permute.xlu0 %473
    %476 = vset.pattern.permute.xlu0 8
    %477 = vperm.xlu0 %476, %v57
    %v478 = vpop.permute.xlu0 %477
    %v480 = vmul.f32 %v464, %v474
    %v481 = vmul.f32 %v465, %v474
    %v482 = vmul.f32 %v466, %v474
    %v483 = vmul.f32 %v467, %v474
    %v484 = vmul.f32 %v468, %v478
    %v485 = vmul.f32 %v469, %v478
    %v486 = vmul.f32 %v470, %v478
    %v487 = vmul.f32 %v471, %v478
    %488 = vrot.lane.b32.xlu0 %v396, 16
    %v489 = vpop.permute.xlu0 %488
    %490 = vrot.lane.b32.xlu0 %v400, 16
    %v491 = vpop.permute.xlu0 %490
    %492 = vrot.lane.b32.xlu0 %v397, 16
    %v493 = vpop.permute.xlu0 %492
    %494 = vrot.lane.b32.xlu0 %v401, 16
    %v495 = vpop.permute.xlu0 %494
    %496 = vrot.lane.b32.xlu0 %v398, 16
    %v497 = vpop.permute.xlu0 %496
    %498 = vrot.lane.b32.xlu0 %v402, 16
    %v499 = vpop.permute.xlu0 %498
    %500 = vrot.lane.b32.xlu0 %v399, 16
    %v501 = vpop.permute.xlu0 %500
    %502 = vrot.lane.b32.xlu0 %v403, 16
    %v503 = vpop.permute.xlu0 %502
    %vm504 = vcmp.lt.s32.totalorder %v432, 16
    %v505 = vsel %vm504, %v497, %v501
    %v506 = vsel %vm504, %v499, %v503
    %v507 = vsel %vm504, %v493, %v497
    %v508 = vsel %vm504, %v495, %v499
    %v509 = vsel %vm504, %v489, %v493
    %v510 = vsel %vm504, %v491, %v495
    %v511 = vsel %vm504, %v501, %v489
    %v512 = vsel %vm504, %v503, %v491
    %v513 = vsel %vm405, 1, 0
    %v514 = vlaneseq
    %v515 = vshrl.u32 %v514, 7
    %v516 = vsub.s32 0, %v515
    %v517 = vrot.slane %v513, %v516
    %v518 = vlaneseq
    %v519 = vshrl.u32 %v518, 7
    %v520 = vsub.s32 1, %v519
    %v521 = vrot.slane %v513, %v520
    %v522 = vlaneseq
    %v523 = vshrl.u32 %v522, 7
    %v524 = vsub.s32 2, %v523
    %v525 = vrot.slane %v513, %v524
    %v526 = vlaneseq
    %v527 = vshrl.u32 %v526, 7
    %v528 = vsub.s32 3, %v527
    %v529 = vrot.slane %v513, %v528
    %vm530 = vcmp.eq.s32.totalorder %v517, 1
    %vm531 = vcmp.eq.s32.totalorder %v521, 1
    %vm532 = vcmp.eq.s32.totalorder %v525, 1
    %vm533 = vcmp.eq.s32.totalorder %v529, 1
    %v534 = vsel %vm530, %v511, 0.0
    %v535 = vsel %vm531, %v509, 0.0
    %v536 = vsel %vm532, %v507, 0.0
    %v537 = vsel %vm533, %v505, 0.0
    %v538 = vsel %vm530, %v512, 0.0
    %v539 = vsel %vm531, %v510, 0.0
    %v540 = vsel %vm532, %v508, 0.0
    %v541 = vsel %vm533, %v506, 0.0
    %542 = vset.pattern.permute.xlu0 9
    %543 = vperm.xlu0 %542, %v56
    %v544 = vpop.permute.xlu0 %543
    %546 = vset.pattern.permute.xlu0 9
    %547 = vperm.xlu0 %546, %v57
    %v548 = vpop.permute.xlu0 %547
    %v550 = vmul.f32 %v534, %v544
    %v551 = vmul.f32 %v535, %v544
    %v552 = vmul.f32 %v536, %v544
    %v553 = vmul.f32 %v537, %v544
    %v554 = vmul.f32 %v538, %v548
    %v555 = vmul.f32 %v539, %v548
    %v556 = vmul.f32 %v540, %v548
    %v557 = vmul.f32 %v541, %v548
    %v558 = vadd.f32 %v480, %v550
    %v559 = vadd.f32 %v481, %v551
    %v560 = vadd.f32 %v482, %v552
    %v561 = vadd.f32 %v483, %v553
    %v562 = vadd.f32 %v484, %v554
    %v563 = vadd.f32 %v485, %v555
    %v564 = vadd.f32 %v486, %v556
    %v565 = vadd.f32 %v487, %v557
    %566 = vrot.lane.b32.xlu0 %v396, 15
    %v567 = vpop.permute.xlu0 %566
    %568 = vrot.lane.b32.xlu0 %v400, 15
    %v569 = vpop.permute.xlu0 %568
    %570 = vrot.lane.b32.xlu0 %v397, 15
    %v571 = vpop.permute.xlu0 %570
    %572 = vrot.lane.b32.xlu0 %v401, 15
    %v573 = vpop.permute.xlu0 %572
    %574 = vrot.lane.b32.xlu0 %v398, 15
    %v575 = vpop.permute.xlu0 %574
    %576 = vrot.lane.b32.xlu0 %v402, 15
    %v577 = vpop.permute.xlu0 %576
    %578 = vrot.lane.b32.xlu0 %v399, 15
    %v579 = vpop.permute.xlu0 %578
    %580 = vrot.lane.b32.xlu0 %v403, 15
    %v581 = vpop.permute.xlu0 %580
    %vm582 = vcmp.lt.s32.totalorder %v432, 15
    %v583 = vsel %vm582, %v575, %v579
    %v584 = vsel %vm582, %v577, %v581
    %v585 = vsel %vm582, %v571, %v575
    %v586 = vsel %vm582, %v573, %v577
    %v587 = vsel %vm582, %v567, %v571
    %v588 = vsel %vm582, %v569, %v573
    %v589 = vsel %vm582, %v579, %v567
    %v590 = vsel %vm582, %v581, %v569
    %vm591 = vmand %vm405, %vm414
    %v592 = vsel %vm591, 1, 0
    %v593 = vlaneseq
    %v594 = vshrl.u32 %v593, 7
    %v595 = vsub.s32 0, %v594
    %v596 = vrot.slane %v592, %v595
    %v597 = vlaneseq
    %v598 = vshrl.u32 %v597, 7
    %v599 = vsub.s32 1, %v598
    %v600 = vrot.slane %v592, %v599
    %v601 = vlaneseq
    %v602 = vshrl.u32 %v601, 7
    %v603 = vsub.s32 2, %v602
    %v604 = vrot.slane %v592, %v603
    %v605 = vlaneseq
    %v606 = vshrl.u32 %v605, 7
    %v607 = vsub.s32 3, %v606
    %v608 = vrot.slane %v592, %v607
    %vm609 = vcmp.eq.s32.totalorder %v596, 1
    %vm610 = vcmp.eq.s32.totalorder %v600, 1
    %vm611 = vcmp.eq.s32.totalorder %v604, 1
    %vm612 = vcmp.eq.s32.totalorder %v608, 1
    %v613 = vsel %vm609, %v589, 0.0
    %v614 = vsel %vm610, %v587, 0.0
    %v615 = vsel %vm611, %v585, 0.0
    %v616 = vsel %vm612, %v583, 0.0
    %v617 = vsel %vm609, %v590, 0.0
    %v618 = vsel %vm610, %v588, 0.0
    %v619 = vsel %vm611, %v586, 0.0
    %v620 = vsel %vm612, %v584, 0.0
    %621 = vset.pattern.permute.xlu0 10
    %622 = vperm.xlu0 %621, %v56
    %v623 = vpop.permute.xlu0 %622
    %625 = vset.pattern.permute.xlu0 10
    %626 = vperm.xlu0 %625, %v57
    %v627 = vpop.permute.xlu0 %626
    %v629 = vmul.f32 %v613, %v623
    %v630 = vmul.f32 %v614, %v623
    %v631 = vmul.f32 %v615, %v623
    %v632 = vmul.f32 %v616, %v623
    %v633 = vmul.f32 %v617, %v627
    %v634 = vmul.f32 %v618, %v627
    %v635 = vmul.f32 %v619, %v627
    %v636 = vmul.f32 %v620, %v627
    %v637 = vadd.f32 %v558, %v629
    %v638 = vadd.f32 %v559, %v630
    %v639 = vadd.f32 %v560, %v631
    %v640 = vadd.f32 %v561, %v632
    %v641 = vadd.f32 %v562, %v633
    %v642 = vadd.f32 %v563, %v634
    %v643 = vadd.f32 %v564, %v635
    %v644 = vadd.f32 %v565, %v636
    %645 = vrot.lane.b32.xlu0 %v396, 1
    %v646 = vpop.permute.xlu0 %645
    %647 = vrot.lane.b32.xlu0 %v400, 1
    %v648 = vpop.permute.xlu0 %647
    %649 = vrot.lane.b32.xlu0 %v397, 1
    %v650 = vpop.permute.xlu0 %649
    %651 = vrot.lane.b32.xlu0 %v401, 1
    %v652 = vpop.permute.xlu0 %651
    %653 = vrot.lane.b32.xlu0 %v398, 1
    %v654 = vpop.permute.xlu0 %653
    %655 = vrot.lane.b32.xlu0 %v402, 1
    %v656 = vpop.permute.xlu0 %655
    %657 = vrot.lane.b32.xlu0 %v399, 1
    %v658 = vpop.permute.xlu0 %657
    %659 = vrot.lane.b32.xlu0 %v403, 1
    %v660 = vpop.permute.xlu0 %659
    %vm661 = vcmp.lt.s32.totalorder %v432, 1
    %v662 = vsel %vm661, %v654, %v658
    %v663 = vsel %vm661, %v656, %v660
    %v664 = vsel %vm661, %v650, %v654
    %v665 = vsel %vm661, %v652, %v656
    %v666 = vsel %vm661, %v646, %v650
    %v667 = vsel %vm661, %v648, %v652
    %v668 = vsel %vm661, %v658, %v646
    %v669 = vsel %vm661, %v660, %v648
    %v670 = vsel %vm411, 1, 0
    %v671 = vlaneseq
    %v672 = vshrl.u32 %v671, 7
    %v673 = vsub.s32 0, %v672
    %v674 = vrot.slane %v670, %v673
    %v675 = vlaneseq
    %v676 = vshrl.u32 %v675, 7
    %v677 = vsub.s32 1, %v676
    %v678 = vrot.slane %v670, %v677
    %v679 = vlaneseq
    %v680 = vshrl.u32 %v679, 7
    %v681 = vsub.s32 2, %v680
    %v682 = vrot.slane %v670, %v681
    %v683 = vlaneseq
    %v684 = vshrl.u32 %v683, 7
    %v685 = vsub.s32 3, %v684
    %v686 = vrot.slane %v670, %v685
    %vm687 = vcmp.eq.s32.totalorder %v674, 1
    %vm688 = vcmp.eq.s32.totalorder %v678, 1
    %vm689 = vcmp.eq.s32.totalorder %v682, 1
    %vm690 = vcmp.eq.s32.totalorder %v686, 1
    %v691 = vsel %vm687, %v668, 0.0
    %v692 = vsel %vm688, %v666, 0.0
    %v693 = vsel %vm689, %v664, 0.0
    %v694 = vsel %vm690, %v662, 0.0
    %v695 = vsel %vm687, %v669, 0.0
    %v696 = vsel %vm688, %v667, 0.0
    %v697 = vsel %vm689, %v665, 0.0
    %v698 = vsel %vm690, %v663, 0.0
    %699 = vset.pattern.permute.xlu0 11
    %700 = vperm.xlu0 %699, %v56
    %v701 = vpop.permute.xlu0 %700
    %703 = vset.pattern.permute.xlu0 11
    %704 = vperm.xlu0 %703, %v57
    %v705 = vpop.permute.xlu0 %704
    %v707 = vmul.f32 %v691, %v701
    %v708 = vmul.f32 %v692, %v701
    %v709 = vmul.f32 %v693, %v701
    %v710 = vmul.f32 %v694, %v701
    %v711 = vmul.f32 %v695, %v705
    %v712 = vmul.f32 %v696, %v705
    %v713 = vmul.f32 %v697, %v705
    %v714 = vmul.f32 %v698, %v705
    %v715 = vadd.f32 %v637, %v707
    %v716 = vadd.f32 %v638, %v708
    %v717 = vadd.f32 %v639, %v709
    %v718 = vadd.f32 %v640, %v710
    %v719 = vadd.f32 %v641, %v711
    %v720 = vadd.f32 %v642, %v712
    %v721 = vadd.f32 %v643, %v713
    %v722 = vadd.f32 %v644, %v714
    %723 = vset.pattern.permute.xlu0 12
    %724 = vperm.xlu0 %723, %v56
    %v725 = vpop.permute.xlu0 %724
    %727 = vset.pattern.permute.xlu0 12
    %728 = vperm.xlu0 %727, %v57
    %v729 = vpop.permute.xlu0 %728
    %v731 = vmul.f32 %v396, %v725
    %v732 = vmul.f32 %v397, %v725
    %v733 = vmul.f32 %v398, %v725
    %v734 = vmul.f32 %v399, %v725
    %v735 = vmul.f32 %v400, %v729
    %v736 = vmul.f32 %v401, %v729
    %v737 = vmul.f32 %v402, %v729
    %v738 = vmul.f32 %v403, %v729
    %v739 = vadd.f32 %v715, %v731
    %v740 = vadd.f32 %v716, %v732
    %v741 = vadd.f32 %v717, %v733
    %v742 = vadd.f32 %v718, %v734
    %v743 = vadd.f32 %v719, %v735
    %v744 = vadd.f32 %v720, %v736
    %v745 = vadd.f32 %v721, %v737
    %v746 = vadd.f32 %v722, %v738
    %747 = vrot.lane.b32.xlu0 %v396, 127
    %v748 = vpop.permute.xlu0 %747
    %749 = vrot.lane.b32.xlu0 %v400, 127
    %v750 = vpop.permute.xlu0 %749
    %751 = vrot.lane.b32.xlu0 %v397, 127
    %v752 = vpop.permute.xlu0 %751
    %753 = vrot.lane.b32.xlu0 %v401, 127
    %v754 = vpop.permute.xlu0 %753
    %755 = vrot.lane.b32.xlu0 %v398, 127
    %v756 = vpop.permute.xlu0 %755
    %757 = vrot.lane.b32.xlu0 %v402, 127
    %v758 = vpop.permute.xlu0 %757
    %759 = vrot.lane.b32.xlu0 %v399, 127
    %v760 = vpop.permute.xlu0 %759
    %761 = vrot.lane.b32.xlu0 %v403, 127
    %v762 = vpop.permute.xlu0 %761
    %vm763 = vcmp.lt.s32.totalorder %v432, 127
    %v764 = vsel %vm763, %v756, %v760
    %v765 = vsel %vm763, %v758, %v762
    %v766 = vsel %vm763, %v752, %v756
    %v767 = vsel %vm763, %v754, %v758
    %v768 = vsel %vm763, %v748, %v752
    %v769 = vsel %vm763, %v750, %v754
    %v770 = vsel %vm763, %v760, %v748
    %v771 = vsel %vm763, %v762, %v750
    %v772 = vsel %vm414, 1, 0
    %v773 = vlaneseq
    %v774 = vshrl.u32 %v773, 7
    %v775 = vsub.s32 0, %v774
    %v776 = vrot.slane %v772, %v775
    %v777 = vlaneseq
    %v778 = vshrl.u32 %v777, 7
    %v779 = vsub.s32 1, %v778
    %v780 = vrot.slane %v772, %v779
    %v781 = vlaneseq
    %v782 = vshrl.u32 %v781, 7
    %v783 = vsub.s32 2, %v782
    %v784 = vrot.slane %v772, %v783
    %v785 = vlaneseq
    %v786 = vshrl.u32 %v785, 7
    %v787 = vsub.s32 3, %v786
    %v788 = vrot.slane %v772, %v787
    %vm789 = vcmp.eq.s32.totalorder %v776, 1
    %vm790 = vcmp.eq.s32.totalorder %v780, 1
    %vm791 = vcmp.eq.s32.totalorder %v784, 1
    %vm792 = vcmp.eq.s32.totalorder %v788, 1
    %v793 = vsel %vm789, %v768, 0.0
    %v794 = vsel %vm790, %v766, 0.0
    %v795 = vsel %vm791, %v764, 0.0
    %v796 = vsel %vm792, %v770, 0.0
    %v797 = vsel %vm789, %v769, 0.0
    %v798 = vsel %vm790, %v767, 0.0
    %v799 = vsel %vm791, %v765, 0.0
    %v800 = vsel %vm792, %v771, 0.0
    %801 = vset.pattern.permute.xlu0 13
    %802 = vperm.xlu0 %801, %v56
    %v803 = vpop.permute.xlu0 %802
    %805 = vset.pattern.permute.xlu0 13
    %806 = vperm.xlu0 %805, %v57
    %v807 = vpop.permute.xlu0 %806
    %v809 = vmul.f32 %v793, %v803
    %v810 = vmul.f32 %v794, %v803
    %v811 = vmul.f32 %v795, %v803
    %v812 = vmul.f32 %v796, %v803
    %v813 = vmul.f32 %v797, %v807
    %v814 = vmul.f32 %v798, %v807
    %v815 = vmul.f32 %v799, %v807
    %v816 = vmul.f32 %v800, %v807
    %v817 = vadd.f32 %v739, %v809
    %v818 = vadd.f32 %v740, %v810
    %v819 = vadd.f32 %v741, %v811
    %v820 = vadd.f32 %v742, %v812
    %v821 = vadd.f32 %v743, %v813
    %v822 = vadd.f32 %v744, %v814
    %v823 = vadd.f32 %v745, %v815
    %v824 = vadd.f32 %v746, %v816
    %825 = vrot.lane.b32.xlu0 %v396, 113
    %v826 = vpop.permute.xlu0 %825
    %827 = vrot.lane.b32.xlu0 %v400, 113
    %v828 = vpop.permute.xlu0 %827
    %829 = vrot.lane.b32.xlu0 %v397, 113
    %v830 = vpop.permute.xlu0 %829
    %831 = vrot.lane.b32.xlu0 %v401, 113
    %v832 = vpop.permute.xlu0 %831
    %833 = vrot.lane.b32.xlu0 %v398, 113
    %v834 = vpop.permute.xlu0 %833
    %835 = vrot.lane.b32.xlu0 %v402, 113
    %v836 = vpop.permute.xlu0 %835
    %837 = vrot.lane.b32.xlu0 %v399, 113
    %v838 = vpop.permute.xlu0 %837
    %839 = vrot.lane.b32.xlu0 %v403, 113
    %v840 = vpop.permute.xlu0 %839
    %vm841 = vcmp.lt.s32.totalorder %v432, 113
    %v842 = vsel %vm841, %v834, %v838
    %v843 = vsel %vm841, %v836, %v840
    %v844 = vsel %vm841, %v830, %v834
    %v845 = vsel %vm841, %v832, %v836
    %v846 = vsel %vm841, %v826, %v830
    %v847 = vsel %vm841, %v828, %v832
    %v848 = vsel %vm841, %v838, %v826
    %v849 = vsel %vm841, %v840, %v828
    %vm850 = vmand %vm408, %vm411
    %v851 = vsel %vm850, 1, 0
    %v852 = vlaneseq
    %v853 = vshrl.u32 %v852, 7
    %v854 = vsub.s32 0, %v853
    %v855 = vrot.slane %v851, %v854
    %v856 = vlaneseq
    %v857 = vshrl.u32 %v856, 7
    %v858 = vsub.s32 1, %v857
    %v859 = vrot.slane %v851, %v858
    %v860 = vlaneseq
    %v861 = vshrl.u32 %v860, 7
    %v862 = vsub.s32 2, %v861
    %v863 = vrot.slane %v851, %v862
    %v864 = vlaneseq
    %v865 = vshrl.u32 %v864, 7
    %v866 = vsub.s32 3, %v865
    %v867 = vrot.slane %v851, %v866
    %vm868 = vcmp.eq.s32.totalorder %v855, 1
    %vm869 = vcmp.eq.s32.totalorder %v859, 1
    %vm870 = vcmp.eq.s32.totalorder %v863, 1
    %vm871 = vcmp.eq.s32.totalorder %v867, 1
    %v872 = vsel %vm868, %v846, 0.0
    %v873 = vsel %vm869, %v844, 0.0
    %v874 = vsel %vm870, %v842, 0.0
    %v875 = vsel %vm871, %v848, 0.0
    %v876 = vsel %vm868, %v847, 0.0
    %v877 = vsel %vm869, %v845, 0.0
    %v878 = vsel %vm870, %v843, 0.0
    %v879 = vsel %vm871, %v849, 0.0
    %880 = vset.pattern.permute.xlu0 14
    %881 = vperm.xlu0 %880, %v56
    %v882 = vpop.permute.xlu0 %881
    %884 = vset.pattern.permute.xlu0 14
    %885 = vperm.xlu0 %884, %v57
    %v886 = vpop.permute.xlu0 %885
    %v888 = vmul.f32 %v872, %v882
    %v889 = vmul.f32 %v873, %v882
    %v890 = vmul.f32 %v874, %v882
    %v891 = vmul.f32 %v875, %v882
    %v892 = vmul.f32 %v876, %v886
    %v893 = vmul.f32 %v877, %v886
    %v894 = vmul.f32 %v878, %v886
    %v895 = vmul.f32 %v879, %v886
    %v896 = vadd.f32 %v817, %v888
    %v897 = vadd.f32 %v818, %v889
    %v898 = vadd.f32 %v819, %v890
    %v899 = vadd.f32 %v820, %v891
    %v900 = vadd.f32 %v821, %v892
    %v901 = vadd.f32 %v822, %v893
    %v902 = vadd.f32 %v823, %v894
    %v903 = vadd.f32 %v824, %v895
    %904 = vrot.lane.b32.xlu0 %v396, 112
    %v905 = vpop.permute.xlu0 %904
    %906 = vrot.lane.b32.xlu0 %v400, 112
    %v907 = vpop.permute.xlu0 %906
    %908 = vrot.lane.b32.xlu0 %v397, 112
    %v909 = vpop.permute.xlu0 %908
    %910 = vrot.lane.b32.xlu0 %v401, 112
    %v911 = vpop.permute.xlu0 %910
    %912 = vrot.lane.b32.xlu0 %v398, 112
    %v913 = vpop.permute.xlu0 %912
    %914 = vrot.lane.b32.xlu0 %v402, 112
    %v915 = vpop.permute.xlu0 %914
    %916 = vrot.lane.b32.xlu0 %v399, 112
    %v917 = vpop.permute.xlu0 %916
    %918 = vrot.lane.b32.xlu0 %v403, 112
    %v919 = vpop.permute.xlu0 %918
    %vm920 = vcmp.lt.s32.totalorder %v432, 112
    %v921 = vsel %vm920, %v913, %v917
    %v922 = vsel %vm920, %v915, %v919
    %v923 = vsel %vm920, %v909, %v913
    %v924 = vsel %vm920, %v911, %v915
    %v925 = vsel %vm920, %v905, %v909
    %v926 = vsel %vm920, %v907, %v911
    %v927 = vsel %vm920, %v917, %v905
    %v928 = vsel %vm920, %v919, %v907
    %v929 = vsel %vm408, 1, 0
    %v930 = vlaneseq
    %v931 = vshrl.u32 %v930, 7
    %v932 = vsub.s32 0, %v931
    %v933 = vrot.slane %v929, %v932
    %v934 = vlaneseq
    %v935 = vshrl.u32 %v934, 7
    %v936 = vsub.s32 1, %v935
    %v937 = vrot.slane %v929, %v936
    %v938 = vlaneseq
    %v939 = vshrl.u32 %v938, 7
    %v940 = vsub.s32 2, %v939
    %v941 = vrot.slane %v929, %v940
    %v942 = vlaneseq
    %v943 = vshrl.u32 %v942, 7
    %v944 = vsub.s32 3, %v943
    %v945 = vrot.slane %v929, %v944
    %vm946 = vcmp.eq.s32.totalorder %v933, 1
    %vm947 = vcmp.eq.s32.totalorder %v937, 1
    %vm948 = vcmp.eq.s32.totalorder %v941, 1
    %vm949 = vcmp.eq.s32.totalorder %v945, 1
    %v950 = vsel %vm946, %v925, 0.0
    %v951 = vsel %vm947, %v923, 0.0
    %v952 = vsel %vm948, %v921, 0.0
    %v953 = vsel %vm949, %v927, 0.0
    %v954 = vsel %vm946, %v926, 0.0
    %v955 = vsel %vm947, %v924, 0.0
    %v956 = vsel %vm948, %v922, 0.0
    %v957 = vsel %vm949, %v928, 0.0
    %958 = vset.pattern.permute.xlu0 15
    %959 = vperm.xlu0 %958, %v56
    %v960 = vpop.permute.xlu0 %959
    %962 = vset.pattern.permute.xlu0 15
    %963 = vperm.xlu0 %962, %v57
    %v964 = vpop.permute.xlu0 %963
    %v966 = vmul.f32 %v950, %v960
    %v967 = vmul.f32 %v951, %v960
    %v968 = vmul.f32 %v952, %v960
    %v969 = vmul.f32 %v953, %v960
    %v970 = vmul.f32 %v954, %v964
    %v971 = vmul.f32 %v955, %v964
    %v972 = vmul.f32 %v956, %v964
    %v973 = vmul.f32 %v957, %v964
    %v974 = vadd.f32 %v896, %v966
    %v975 = vadd.f32 %v897, %v967
    %v976 = vadd.f32 %v898, %v968
    %v977 = vadd.f32 %v899, %v969
    %v978 = vadd.f32 %v900, %v970
    %v979 = vadd.f32 %v901, %v971
    %v980 = vadd.f32 %v902, %v972
    %v981 = vadd.f32 %v903, %v973
    %982 = vrot.lane.b32.xlu0 %v396, 111
    %v983 = vpop.permute.xlu0 %982
    %984 = vrot.lane.b32.xlu0 %v400, 111
    %v985 = vpop.permute.xlu0 %984
    %986 = vrot.lane.b32.xlu0 %v397, 111
    %v987 = vpop.permute.xlu0 %986
    %988 = vrot.lane.b32.xlu0 %v401, 111
    %v989 = vpop.permute.xlu0 %988
    %990 = vrot.lane.b32.xlu0 %v398, 111
    %v991 = vpop.permute.xlu0 %990
    %992 = vrot.lane.b32.xlu0 %v402, 111
    %v993 = vpop.permute.xlu0 %992
    %994 = vrot.lane.b32.xlu0 %v399, 111
    %v995 = vpop.permute.xlu0 %994
    %996 = vrot.lane.b32.xlu0 %v403, 111
    %v997 = vpop.permute.xlu0 %996
    %vm998 = vcmp.lt.s32.totalorder %v432, 111
    %v999 = vsel %vm998, %v991, %v995
    %v1000 = vsel %vm998, %v993, %v997
    %v1001 = vsel %vm998, %v987, %v991
    %v1002 = vsel %vm998, %v989, %v993
    %v1003 = vsel %vm998, %v983, %v987
    %v1004 = vsel %vm998, %v985, %v989
    %v1005 = vsel %vm998, %v995, %v983
    %v1006 = vsel %vm998, %v997, %v985
    %vm1007 = vmand %vm408, %vm414
    %v1008 = vsel %vm1007, 1, 0
    %v1009 = vlaneseq
    %v1010 = vshrl.u32 %v1009, 7
    %v1011 = vsub.s32 0, %v1010
    %v1012 = vrot.slane %v1008, %v1011
    %v1013 = vlaneseq
    %v1014 = vshrl.u32 %v1013, 7
    %v1015 = vsub.s32 1, %v1014
    %v1016 = vrot.slane %v1008, %v1015
    %v1017 = vlaneseq
    %v1018 = vshrl.u32 %v1017, 7
    %v1019 = vsub.s32 2, %v1018
    %v1020 = vrot.slane %v1008, %v1019
    %v1021 = vlaneseq
    %v1022 = vshrl.u32 %v1021, 7
    %v1023 = vsub.s32 3, %v1022
    %v1024 = vrot.slane %v1008, %v1023
    %vm1025 = vcmp.eq.s32.totalorder %v1012, 1
    %vm1026 = vcmp.eq.s32.totalorder %v1016, 1
    %vm1027 = vcmp.eq.s32.totalorder %v1020, 1
    %vm1028 = vcmp.eq.s32.totalorder %v1024, 1
    %v1029 = vsel %vm1025, %v1003, 0.0
    %v1030 = vsel %vm1026, %v1001, 0.0
    %v1031 = vsel %vm1027, %v999, 0.0
    %v1032 = vsel %vm1028, %v1005, 0.0
    %v1033 = vsel %vm1025, %v1004, 0.0
    %v1034 = vsel %vm1026, %v1002, 0.0
    %v1035 = vsel %vm1027, %v1000, 0.0
    %v1036 = vsel %vm1028, %v1006, 0.0
    %1037 = vset.pattern.permute.xlu0 16
    %1038 = vperm.xlu0 %1037, %v56
    %v1039 = vpop.permute.xlu0 %1038
    %1041 = vset.pattern.permute.xlu0 16
    %1042 = vperm.xlu0 %1041, %v57
    %v1043 = vpop.permute.xlu0 %1042
    %v1045 = vmul.f32 %v1029, %v1039
    %v1046 = vmul.f32 %v1030, %v1039
    %v1047 = vmul.f32 %v1031, %v1039
    %v1048 = vmul.f32 %v1032, %v1039
    %v1049 = vmul.f32 %v1033, %v1043
    %v1050 = vmul.f32 %v1034, %v1043
    %v1051 = vmul.f32 %v1035, %v1043
    %v1052 = vmul.f32 %v1036, %v1043
    %v1053 = vadd.f32 %v974, %v1045
    %v1054 = vadd.f32 %v975, %v1046
    %v1055 = vadd.f32 %v976, %v1047
    %v1056 = vadd.f32 %v977, %v1048
    %v1057 = vadd.f32 %v978, %v1049
    %v1058 = vadd.f32 %v979, %v1050
    %v1059 = vadd.f32 %v980, %v1051
    %v1060 = vadd.f32 %v981, %v1052
    %1061 = vset.pattern.permute.xlu0 34
    %1062 = vperm.xlu0 %1061, %v56
    %v1063 = vpop.permute.xlu0 %1062
    %1065 = vset.pattern.permute.xlu0 34
    %1066 = vperm.xlu0 %1065, %v57
    %v1067 = vpop.permute.xlu0 %1066
    %v1069 = vadd.f32 %v1053, %v1063
    %v1070 = vadd.f32 %v1054, %v1063
    %v1071 = vadd.f32 %v1055, %v1063
    %v1072 = vadd.f32 %v1056, %v1063
    %v1073 = vadd.f32 %v1057, %v1067
    %v1074 = vadd.f32 %v1058, %v1067
    %v1075 = vadd.f32 %v1059, %v1067
    %v1076 = vadd.f32 %v1060, %v1067
    %v1077 = vmax.f32 %v1069, 0.0
    %v1078 = vmax.f32 %v1070, 0.0
    %v1079 = vmax.f32 %v1071, 0.0
    %v1080 = vmax.f32 %v1072, 0.0
    %v1081 = vmax.f32 %v1073, 0.0
    %v1082 = vmax.f32 %v1074, 0.0
    %v1083 = vmax.f32 %v1075, 0.0
    %v1084 = vmax.f32 %v1076, 0.0
    %v1085 = vmin.f32 %v1077, 6.0
    %v1086 = vmin.f32 %v1078, 6.0
    %v1087 = vmin.f32 %v1079, 6.0
    %v1088 = vmin.f32 %v1080, 6.0
    %v1089 = vmin.f32 %v1081, 6.0
    %v1090 = vmin.f32 %v1082, 6.0
    %v1091 = vmin.f32 %v1083, 6.0
    %v1092 = vmin.f32 %v1084, 6.0
    %1093 = vset.pattern.permute.xlu0 17
    %1094 = vperm.xlu0 %1093, %v56
    %v1095 = vpop.permute.xlu0 %1094
    %v1097 = vlaneseq
    %v1098 = vshrl.u32 %v1097, 7
    %v1099 = vsub.s32 0, %v1098
    %v1100 = vrot.slane %v1085, %v1099
    %v1101 = vlaneseq
    %v1102 = vshrl.u32 %v1101, 7
    %v1103 = vsub.s32 0, %v1102
    %v1104 = vrot.slane %v1086, %v1103
    %v1105 = vlaneseq
    %v1106 = vshrl.u32 %v1105, 7
    %v1107 = vsub.s32 0, %v1106
    %v1108 = vrot.slane %v1087, %v1107
    %v1109 = vlaneseq
    %v1110 = vshrl.u32 %v1109, 7
    %v1111 = vsub.s32 0, %v1110
    %v1112 = vrot.slane %v1088, %v1111
    %v1113 = vmul.f32 %v1095, %v1100
    %v1114 = vmul.f32 %v1095, %v1104
    %v1115 = vmul.f32 %v1095, %v1108
    %v1116 = vmul.f32 %v1095, %v1112
    %1117 = vset.pattern.permute.xlu0 18
    %1118 = vperm.xlu0 %1117, %v56
    %v1119 = vpop.permute.xlu0 %1118
    %v1121 = vlaneseq
    %v1122 = vshrl.u32 %v1121, 7
    %v1123 = vsub.s32 1, %v1122
    %v1124 = vrot.slane %v1085, %v1123
    %v1125 = vlaneseq
    %v1126 = vshrl.u32 %v1125, 7
    %v1127 = vsub.s32 1, %v1126
    %v1128 = vrot.slane %v1086, %v1127
    %v1129 = vlaneseq
    %v1130 = vshrl.u32 %v1129, 7
    %v1131 = vsub.s32 1, %v1130
    %v1132 = vrot.slane %v1087, %v1131
    %v1133 = vlaneseq
    %v1134 = vshrl.u32 %v1133, 7
    %v1135 = vsub.s32 1, %v1134
    %v1136 = vrot.slane %v1088, %v1135
    %v1137 = vmul.f32 %v1119, %v1124
    %v1138 = vmul.f32 %v1119, %v1128
    %v1139 = vmul.f32 %v1119, %v1132
    %v1140 = vmul.f32 %v1119, %v1136
    %v1141 = vadd.f32 %v1113, %v1137
    %v1142 = vadd.f32 %v1114, %v1138
    %v1143 = vadd.f32 %v1115, %v1139
    %v1144 = vadd.f32 %v1116, %v1140
    %1145 = vset.pattern.permute.xlu0 19
    %1146 = vperm.xlu0 %1145, %v56
    %v1147 = vpop.permute.xlu0 %1146
    %v1149 = vlaneseq
    %v1150 = vshrl.u32 %v1149, 7
    %v1151 = vsub.s32 2, %v1150
    %v1152 = vrot.slane %v1085, %v1151
    %v1153 = vlaneseq
    %v1154 = vshrl.u32 %v1153, 7
    %v1155 = vsub.s32 2, %v1154
    %v1156 = vrot.slane %v1086, %v1155
    %v1157 = vlaneseq
    %v1158 = vshrl.u32 %v1157, 7
    %v1159 = vsub.s32 2, %v1158
    %v1160 = vrot.slane %v1087, %v1159
    %v1161 = vlaneseq
    %v1162 = vshrl.u32 %v1161, 7
    %v1163 = vsub.s32 2, %v1162
    %v1164 = vrot.slane %v1088, %v1163
    %v1165 = vmul.f32 %v1147, %v1152
    %v1166 = vmul.f32 %v1147, %v1156
    %v1167 = vmul.f32 %v1147, %v1160
    %v1168 = vmul.f32 %v1147, %v1164
    %v1169 = vadd.f32 %v1141, %v1165
    %v1170 = vadd.f32 %v1142, %v1166
    %v1171 = vadd.f32 %v1143, %v1167
    %v1172 = vadd.f32 %v1144, %v1168
    %1173 = vset.pattern.permute.xlu0 20
    %1174 = vperm.xlu0 %1173, %v56
    %v1175 = vpop.permute.xlu0 %1174
    %v1177 = vlaneseq
    %v1178 = vshrl.u32 %v1177, 7
    %v1179 = vsub.s32 3, %v1178
    %v1180 = vrot.slane %v1085, %v1179
    %v1181 = vlaneseq
    %v1182 = vshrl.u32 %v1181, 7
    %v1183 = vsub.s32 3, %v1182
    %v1184 = vrot.slane %v1086, %v1183
    %v1185 = vlaneseq
    %v1186 = vshrl.u32 %v1185, 7
    %v1187 = vsub.s32 3, %v1186
    %v1188 = vrot.slane %v1087, %v1187
    %v1189 = vlaneseq
    %v1190 = vshrl.u32 %v1189, 7
    %v1191 = vsub.s32 3, %v1190
    %v1192 = vrot.slane %v1088, %v1191
    %v1193 = vmul.f32 %v1175, %v1180
    %v1194 = vmul.f32 %v1175, %v1184
    %v1195 = vmul.f32 %v1175, %v1188
    %v1196 = vmul.f32 %v1175, %v1192
    %v1197 = vadd.f32 %v1169, %v1193
    %v1198 = vadd.f32 %v1170, %v1194
    %v1199 = vadd.f32 %v1171, %v1195
    %v1200 = vadd.f32 %v1172, %v1196
    %1201 = vset.pattern.permute.xlu0 21
    %1202 = vperm.xlu0 %1201, %v56
    %v1203 = vpop.permute.xlu0 %1202
    %v1205 = vlaneseq
    %v1206 = vshrl.u32 %v1205, 7
    %v1207 = vsub.s32 4, %v1206
    %v1208 = vrot.slane %v1085, %v1207
    %v1209 = vlaneseq
    %v1210 = vshrl.u32 %v1209, 7
    %v1211 = vsub.s32 4, %v1210
    %v1212 = vrot.slane %v1086, %v1211
    %v1213 = vlaneseq
    %v1214 = vshrl.u32 %v1213, 7
    %v1215 = vsub.s32 4, %v1214
    %v1216 = vrot.slane %v1087, %v1215
    %v1217 = vlaneseq
    %v1218 = vshrl.u32 %v1217, 7
    %v1219 = vsub.s32 4, %v1218
    %v1220 = vrot.slane %v1088, %v1219
    %v1221 = vmul.f32 %v1203, %v1208
    %v1222 = vmul.f32 %v1203, %v1212
    %v1223 = vmul.f32 %v1203, %v1216
    %v1224 = vmul.f32 %v1203, %v1220
    %v1225 = vadd.f32 %v1197, %v1221
    %v1226 = vadd.f32 %v1198, %v1222
    %v1227 = vadd.f32 %v1199, %v1223
    %v1228 = vadd.f32 %v1200, %v1224
    %1229 = vset.pattern.permute.xlu0 22
    %1230 = vperm.xlu0 %1229, %v56
    %v1231 = vpop.permute.xlu0 %1230
    %v1233 = vlaneseq
    %v1234 = vshrl.u32 %v1233, 7
    %v1235 = vsub.s32 5, %v1234
    %v1236 = vrot.slane %v1085, %v1235
    %v1237 = vlaneseq
    %v1238 = vshrl.u32 %v1237, 7
    %v1239 = vsub.s32 5, %v1238
    %v1240 = vrot.slane %v1086, %v1239
    %v1241 = vlaneseq
    %v1242 = vshrl.u32 %v1241, 7
    %v1243 = vsub.s32 5, %v1242
    %v1244 = vrot.slane %v1087, %v1243
    %v1245 = vlaneseq
    %v1246 = vshrl.u32 %v1245, 7
    %v1247 = vsub.s32 5, %v1246
    %v1248 = vrot.slane %v1088, %v1247
    %v1249 = vmul.f32 %v1231, %v1236
    %v1250 = vmul.f32 %v1231, %v1240
    %v1251 = vmul.f32 %v1231, %v1244
    %v1252 = vmul.f32 %v1231, %v1248
    %v1253 = vadd.f32 %v1225, %v1249
    %v1254 = vadd.f32 %v1226, %v1250
    %v1255 = vadd.f32 %v1227, %v1251
    %v1256 = vadd.f32 %v1228, %v1252
    %1257 = vset.pattern.permute.xlu0 23
    %1258 = vperm.xlu0 %1257, %v56
    %v1259 = vpop.permute.xlu0 %1258
    %v1261 = vlaneseq
    %v1262 = vshrl.u32 %v1261, 7
    %v1263 = vsub.s32 6, %v1262
    %v1264 = vrot.slane %v1085, %v1263
    %v1265 = vlaneseq
    %v1266 = vshrl.u32 %v1265, 7
    %v1267 = vsub.s32 6, %v1266
    %v1268 = vrot.slane %v1086, %v1267
    %v1269 = vlaneseq
    %v1270 = vshrl.u32 %v1269, 7
    %v1271 = vsub.s32 6, %v1270
    %v1272 = vrot.slane %v1087, %v1271
    %v1273 = vlaneseq
    %v1274 = vshrl.u32 %v1273, 7
    %v1275 = vsub.s32 6, %v1274
    %v1276 = vrot.slane %v1088, %v1275
    %v1277 = vmul.f32 %v1259, %v1264
    %v1278 = vmul.f32 %v1259, %v1268
    %v1279 = vmul.f32 %v1259, %v1272
    %v1280 = vmul.f32 %v1259, %v1276
    %v1281 = vadd.f32 %v1253, %v1277
    %v1282 = vadd.f32 %v1254, %v1278
    %v1283 = vadd.f32 %v1255, %v1279
    %v1284 = vadd.f32 %v1256, %v1280
    %1285 = vset.pattern.permute.xlu0 24
    %1286 = vperm.xlu0 %1285, %v56
    %v1287 = vpop.permute.xlu0 %1286
    %v1289 = vlaneseq
    %v1290 = vshrl.u32 %v1289, 7
    %v1291 = vsub.s32 7, %v1290
    %v1292 = vrot.slane %v1085, %v1291
    %v1293 = vlaneseq
    %v1294 = vshrl.u32 %v1293, 7
    %v1295 = vsub.s32 7, %v1294
    %v1296 = vrot.slane %v1086, %v1295
    %v1297 = vlaneseq
    %v1298 = vshrl.u32 %v1297, 7
    %v1299 = vsub.s32 7, %v1298
    %v1300 = vrot.slane %v1087, %v1299
    %v1301 = vlaneseq
    %v1302 = vshrl.u32 %v1301, 7
    %v1303 = vsub.s32 7, %v1302
    %v1304 = vrot.slane %v1088, %v1303
    %v1305 = vmul.f32 %v1287, %v1292
    %v1306 = vmul.f32 %v1287, %v1296
    %v1307 = vmul.f32 %v1287, %v1300
    %v1308 = vmul.f32 %v1287, %v1304
    %v1309 = vadd.f32 %v1281, %v1305
    %v1310 = vadd.f32 %v1282, %v1306
    %v1311 = vadd.f32 %v1283, %v1307
    %v1312 = vadd.f32 %v1284, %v1308
    %1313 = vset.pattern.permute.xlu0 25
    %1314 = vperm.xlu0 %1313, %v56
    %v1315 = vpop.permute.xlu0 %1314
    %v1317 = vlaneseq
    %v1318 = vshrl.u32 %v1317, 7
    %v1319 = vsub.s32 0, %v1318
    %v1320 = vrot.slane %v1089, %v1319
    %v1321 = vlaneseq
    %v1322 = vshrl.u32 %v1321, 7
    %v1323 = vsub.s32 0, %v1322
    %v1324 = vrot.slane %v1090, %v1323
    %v1325 = vlaneseq
    %v1326 = vshrl.u32 %v1325, 7
    %v1327 = vsub.s32 0, %v1326
    %v1328 = vrot.slane %v1091, %v1327
    %v1329 = vlaneseq
    %v1330 = vshrl.u32 %v1329, 7
    %v1331 = vsub.s32 0, %v1330
    %v1332 = vrot.slane %v1092, %v1331
    %v1333 = vmul.f32 %v1315, %v1320
    %v1334 = vmul.f32 %v1315, %v1324
    %v1335 = vmul.f32 %v1315, %v1328
    %v1336 = vmul.f32 %v1315, %v1332
    %v1337 = vadd.f32 %v1309, %v1333
    %v1338 = vadd.f32 %v1310, %v1334
    %v1339 = vadd.f32 %v1311, %v1335
    %v1340 = vadd.f32 %v1312, %v1336
    %1341 = vset.pattern.permute.xlu0 26
    %1342 = vperm.xlu0 %1341, %v56
    %v1343 = vpop.permute.xlu0 %1342
    %v1345 = vlaneseq
    %v1346 = vshrl.u32 %v1345, 7
    %v1347 = vsub.s32 1, %v1346
    %v1348 = vrot.slane %v1089, %v1347
    %v1349 = vlaneseq
    %v1350 = vshrl.u32 %v1349, 7
    %v1351 = vsub.s32 1, %v1350
    %v1352 = vrot.slane %v1090, %v1351
    %v1353 = vlaneseq
    %v1354 = vshrl.u32 %v1353, 7
    %v1355 = vsub.s32 1, %v1354
    %v1356 = vrot.slane %v1091, %v1355
    %v1357 = vlaneseq
    %v1358 = vshrl.u32 %v1357, 7
    %v1359 = vsub.s32 1, %v1358
    %v1360 = vrot.slane %v1092, %v1359
    %v1361 = vmul.f32 %v1343, %v1348
    %v1362 = vmul.f32 %v1343, %v1352
    %v1363 = vmul.f32 %v1343, %v1356
    %v1364 = vmul.f32 %v1343, %v1360
    %v1365 = vadd.f32 %v1337, %v1361
    %v1366 = vadd.f32 %v1338, %v1362
    %v1367 = vadd.f32 %v1339, %v1363
    %v1368 = vadd.f32 %v1340, %v1364
    %1369 = vset.pattern.permute.xlu0 27
    %1370 = vperm.xlu0 %1369, %v56
    %v1371 = vpop.permute.xlu0 %1370
    %v1373 = vlaneseq
    %v1374 = vshrl.u32 %v1373, 7
    %v1375 = vsub.s32 2, %v1374
    %v1376 = vrot.slane %v1089, %v1375
    %v1377 = vlaneseq
    %v1378 = vshrl.u32 %v1377, 7
    %v1379 = vsub.s32 2, %v1378
    %v1380 = vrot.slane %v1090, %v1379
    %v1381 = vlaneseq
    %v1382 = vshrl.u32 %v1381, 7
    %v1383 = vsub.s32 2, %v1382
    %v1384 = vrot.slane %v1091, %v1383
    %v1385 = vlaneseq
    %v1386 = vshrl.u32 %v1385, 7
    %v1387 = vsub.s32 2, %v1386
    %v1388 = vrot.slane %v1092, %v1387
    %v1389 = vmul.f32 %v1371, %v1376
    %v1390 = vmul.f32 %v1371, %v1380
    %v1391 = vmul.f32 %v1371, %v1384
    %v1392 = vmul.f32 %v1371, %v1388
    %v1393 = vadd.f32 %v1365, %v1389
    %v1394 = vadd.f32 %v1366, %v1390
    %v1395 = vadd.f32 %v1367, %v1391
    %v1396 = vadd.f32 %v1368, %v1392
    %1397 = vset.pattern.permute.xlu0 28
    %1398 = vperm.xlu0 %1397, %v56
    %v1399 = vpop.permute.xlu0 %1398
    %v1401 = vlaneseq
    %v1402 = vshrl.u32 %v1401, 7
    %v1403 = vsub.s32 3, %v1402
    %v1404 = vrot.slane %v1089, %v1403
    %v1405 = vlaneseq
    %v1406 = vshrl.u32 %v1405, 7
    %v1407 = vsub.s32 3, %v1406
    %v1408 = vrot.slane %v1090, %v1407
    %v1409 = vlaneseq
    %v1410 = vshrl.u32 %v1409, 7
    %v1411 = vsub.s32 3, %v1410
    %v1412 = vrot.slane %v1091, %v1411
    %v1413 = vlaneseq
    %v1414 = vshrl.u32 %v1413, 7
    %v1415 = vsub.s32 3, %v1414
    %v1416 = vrot.slane %v1092, %v1415
    %v1417 = vmul.f32 %v1399, %v1404
    %v1418 = vmul.f32 %v1399, %v1408
    %v1419 = vmul.f32 %v1399, %v1412
    %v1420 = vmul.f32 %v1399, %v1416
    %v1421 = vadd.f32 %v1393, %v1417
    %v1422 = vadd.f32 %v1394, %v1418
    %v1423 = vadd.f32 %v1395, %v1419
    %v1424 = vadd.f32 %v1396, %v1420
    %1425 = vset.pattern.permute.xlu0 29
    %1426 = vperm.xlu0 %1425, %v56
    %v1427 = vpop.permute.xlu0 %1426
    %v1429 = vlaneseq
    %v1430 = vshrl.u32 %v1429, 7
    %v1431 = vsub.s32 4, %v1430
    %v1432 = vrot.slane %v1089, %v1431
    %v1433 = vlaneseq
    %v1434 = vshrl.u32 %v1433, 7
    %v1435 = vsub.s32 4, %v1434
    %v1436 = vrot.slane %v1090, %v1435
    %v1437 = vlaneseq
    %v1438 = vshrl.u32 %v1437, 7
    %v1439 = vsub.s32 4, %v1438
    %v1440 = vrot.slane %v1091, %v1439
    %v1441 = vlaneseq
    %v1442 = vshrl.u32 %v1441, 7
    %v1443 = vsub.s32 4, %v1442
    %v1444 = vrot.slane %v1092, %v1443
    %v1445 = vmul.f32 %v1427, %v1432
    %v1446 = vmul.f32 %v1427, %v1436
    %v1447 = vmul.f32 %v1427, %v1440
    %v1448 = vmul.f32 %v1427, %v1444
    %v1449 = vadd.f32 %v1421, %v1445
    %v1450 = vadd.f32 %v1422, %v1446
    %v1451 = vadd.f32 %v1423, %v1447
    %v1452 = vadd.f32 %v1424, %v1448
    %1453 = vset.pattern.permute.xlu0 30
    %1454 = vperm.xlu0 %1453, %v56
    %v1455 = vpop.permute.xlu0 %1454
    %v1457 = vlaneseq
    %v1458 = vshrl.u32 %v1457, 7
    %v1459 = vsub.s32 5, %v1458
    %v1460 = vrot.slane %v1089, %v1459
    %v1461 = vlaneseq
    %v1462 = vshrl.u32 %v1461, 7
    %v1463 = vsub.s32 5, %v1462
    %v1464 = vrot.slane %v1090, %v1463
    %v1465 = vlaneseq
    %v1466 = vshrl.u32 %v1465, 7
    %v1467 = vsub.s32 5, %v1466
    %v1468 = vrot.slane %v1091, %v1467
    %v1469 = vlaneseq
    %v1470 = vshrl.u32 %v1469, 7
    %v1471 = vsub.s32 5, %v1470
    %v1472 = vrot.slane %v1092, %v1471
    %v1473 = vmul.f32 %v1455, %v1460
    %v1474 = vmul.f32 %v1455, %v1464
    %v1475 = vmul.f32 %v1455, %v1468
    %v1476 = vmul.f32 %v1455, %v1472
    %v1477 = vadd.f32 %v1449, %v1473
    %v1478 = vadd.f32 %v1450, %v1474
    %v1479 = vadd.f32 %v1451, %v1475
    %v1480 = vadd.f32 %v1452, %v1476
    %1481 = vset.pattern.permute.xlu0 31
    %1482 = vperm.xlu0 %1481, %v56
    %v1483 = vpop.permute.xlu0 %1482
    %v1485 = vlaneseq
    %v1486 = vshrl.u32 %v1485, 7
    %v1487 = vsub.s32 6, %v1486
    %v1488 = vrot.slane %v1089, %v1487
    %v1489 = vlaneseq
    %v1490 = vshrl.u32 %v1489, 7
    %v1491 = vsub.s32 6, %v1490
    %v1492 = vrot.slane %v1090, %v1491
    %v1493 = vlaneseq
    %v1494 = vshrl.u32 %v1493, 7
    %v1495 = vsub.s32 6, %v1494
    %v1496 = vrot.slane %v1091, %v1495
    %v1497 = vlaneseq
    %v1498 = vshrl.u32 %v1497, 7
    %v1499 = vsub.s32 6, %v1498
    %v1500 = vrot.slane %v1092, %v1499
    %v1501 = vmul.f32 %v1483, %v1488
    %v1502 = vmul.f32 %v1483, %v1492
    %v1503 = vmul.f32 %v1483, %v1496
    %v1504 = vmul.f32 %v1483, %v1500
    %v1505 = vadd.f32 %v1477, %v1501
    %v1506 = vadd.f32 %v1478, %v1502
    %v1507 = vadd.f32 %v1479, %v1503
    %v1508 = vadd.f32 %v1480, %v1504
    %1509 = vset.pattern.permute.xlu0 32
    %1510 = vperm.xlu0 %1509, %v56
    %v1511 = vpop.permute.xlu0 %1510
    %v1513 = vlaneseq
    %v1514 = vshrl.u32 %v1513, 7
    %v1515 = vsub.s32 7, %v1514
    %v1516 = vrot.slane %v1089, %v1515
    %v1517 = vlaneseq
    %v1518 = vshrl.u32 %v1517, 7
    %v1519 = vsub.s32 7, %v1518
    %v1520 = vrot.slane %v1090, %v1519
    %v1521 = vlaneseq
    %v1522 = vshrl.u32 %v1521, 7
    %v1523 = vsub.s32 7, %v1522
    %v1524 = vrot.slane %v1091, %v1523
    %v1525 = vlaneseq
    %v1526 = vshrl.u32 %v1525, 7
    %v1527 = vsub.s32 7, %v1526
    %v1528 = vrot.slane %v1092, %v1527
    %v1529 = vmul.f32 %v1511, %v1516
    %v1530 = vmul.f32 %v1511, %v1520
    %v1531 = vmul.f32 %v1511, %v1524
    %v1532 = vmul.f32 %v1511, %v1528
    %v1533 = vadd.f32 %v1505, %v1529
    %v1534 = vadd.f32 %v1506, %v1530
    %v1535 = vadd.f32 %v1507, %v1531
    %v1536 = vadd.f32 %v1508, %v1532
    %1537 = vset.pattern.permute.xlu0 35
    %1538 = vperm.xlu0 %1537, %v56
    %v1539 = vpop.permute.xlu0 %1538
    %v1541 = vadd.f32 %v1533, %v1539
    %v1542 = vadd.f32 %v1534, %v1539
    %v1543 = vadd.f32 %v1535, %v1539
    %v1544 = vadd.f32 %v1536, %v1539
    %v1545 = vadd.f32 %v1541, %v52
    %v1546 = vadd.f32 %v1542, %v53
    %v1547 = vadd.f32 %v1543, %v54
    %v1548 = vadd.f32 %v1544, %v55
    %1549 = vst [vmem:[#allocation8] sm:$0xff] %v1545
    %1550 = vst [vmem:[#allocation8 + $0x8] sm:$0xff] %v1546
    %1551 = vst [vmem:[#allocation8 + $0x10] sm:$0xff] %v1547
    %1552 = vst [vmem:[#allocation8 + $0x18] sm:$0xff] %v1548
    // Predicated region
    $region26: #{tpu_custom_call.1} parent=1 // pred_check
      _
    $region27: #{tpu_custom_call.1} parent=1 // pred_check_branch
      %1554 = sbr.rel (0) target = $region29
    $region28: #{tpu_custom_call.1} parent=1 // pred_region
      %s1556 = ssub.s32 512, 512
      %1557 = vsyncadd [#allocation4], %s1556
      %s1559 = sshll.u32 [#allocation8], 4
      %s1560 = int_to_ptr.vmem [resolvable:$true] %s1559
      %1562 = dma.vmem_to_hbm [thread:$0]  %s1560, 512, %s3, [#allocation4]
    $region29: #{tpu_custom_call.1} parent=1 // pred_fallthru
      _
    // Predicated region
    $region30: #{tpu_custom_call.1} parent=1 // pred_check
      _
    $region31: #{tpu_custom_call.1} parent=1 // pred_check_branch
      %1564 = sbr.rel (0) target = $region33
    $region32: #{tpu_custom_call.1} parent=1 // pred_region
      %1565 = dma.done [#allocation4], 512
    $region33: #{tpu_custom_call.1} parent=1 // pred_fallthru
      _
    %1566 = vsyncpa [#allocation3], 1
    %1567 = vsyncpa [#allocation6], 1
    %1568 = vsyncpa [#allocation4], 1

</llo_original>
